<compile_context>
chip_gen: v6e
topology: v6e:2x2x1
jax: 0.10.0
libtpu: 0.0.40
codegen_flags: <defaults>
</compile_context>

<pallas_src>
import functools
import math

import jax
import jax.numpy as jnp
from jax import lax
from jax.experimental import pallas as pl
from jax.experimental.pallas import tpu as pltpu


# Set True for bit-closer parity with the f32 PyTorch reference (f32 matmuls,
# exact softmax reciprocal).  False = bf16 MXU feeding, ~2-4x matmul speedup.
EXACT_F32 = False
_COMPUTE_DTYPE = jnp.float32 if EXACT_F32 else jnp.bfloat16


def _vmem_limit_bytes():
    """Generation-aware scoped-VMEM budget (v5e/v6e: 128 MiB, v7x: 64 MiB)."""
    try:
        cap = pltpu.get_tpu_info().vmem_capacity_bytes
    except Exception:
        cap = 64 * 1024 * 1024
    return max(32 * 1024 * 1024, min(int(cap * 3 // 4), 96 * 1024 * 1024))


_VMEM_LIMIT = _vmem_limit_bytes()


# ------------------------------ tiling helpers ------------------------------

def _pick_tile(dim, target, align):
    """Largest `align`-multiple divisor of `dim` that is <= target, else full dim.

    Full-dim blocks are always legal (BlockSpec (8,128) rule), so falling back
    to `dim` is safe for small / oddly-shaped dimensions.
    """
    if dim <= target:
        return dim
    t = (target // align) * align
    while t >= align:
        if dim % t == 0:
            return t
        t -= align
    return dim


# ------------------------------ Pallas kernels ------------------------------

def _mm_kernel(*refs, has_bias, has_res, act):
    # refs = (x, w, [bias], [residual], out, acc)
    idx = 0
    x_ref = refs[idx]; idx += 1
    w_ref = refs[idx]; idx += 1
    b_ref = None
    r_ref = None
    if has_bias:
        b_ref = refs[idx]; idx += 1
    if has_res:
        r_ref = refs[idx]; idx += 1
    o_ref = refs[idx]; idx += 1
    acc_ref = refs[idx]

    # Residual can seed the accumulator only when no activation follows
    # (activation must see the pre-residual value).  Current call sites never
    # combine residual + activation, so this path is always taken for residual.
    fold_res = has_res and act is None

    @pl.when(pl.program_id(2) == 0)
    def _():
        if fold_res:
            acc_ref[...] = r_ref[...].astype(jnp.float32)
        else:
            acc_ref[...] = jnp.zeros_like(acc_ref)

    acc_ref[...] += jnp.dot(x_ref[...].astype(w_ref.dtype), w_ref[...],
                            preferred_element_type=jnp.float32)

    @pl.when(pl.program_id(2) == pl.num_programs(2) - 1)
    def _():
        y = acc_ref[...]
        if has_bias:
            y = y + b_ref[...].astype(jnp.float32)
        if act == "quick_gelu":
            y = y * jax.nn.sigmoid(1.702 * y)
        if has_res and not fold_res:
            y = y + r_ref[...].astype(jnp.float32)
        o_ref[...] = y.astype(o_ref.dtype)


def _ln_mm_kernel(x_ref, g_ref, bln_ref, w_ref, b_ref, o_ref, xn_ref, *, act, eps):
    # Fused LayerNorm (f32 stats) + matmul + bias (+ QuickGELU).
    # The normalized activation is computed ONCE per row tile (at j == 0) into a
    # (tm, D) VMEM scratch and reused for every N tile.
    @pl.when(pl.program_id(1) == 0)
    def _():
        x = x_ref[...].astype(jnp.float32)
        mean = jnp.mean(x, axis=-1, keepdims=True)
        var = jnp.mean(jnp.square(x - mean), axis=-1, keepdims=True)
        xn = (x - mean) * lax.rsqrt(var + eps)
        xn = xn * g_ref[...].astype(jnp.float32) + bln_ref[...].astype(jnp.float32)
        xn_ref[...] = xn.astype(xn_ref.dtype)

    y = jnp.dot(xn_ref[...], w_ref[...], preferred_element_type=jnp.float32)
    y = y + b_ref[...].astype(jnp.float32)
    if act == "quick_gelu":
        y = y * jax.nn.sigmoid(1.702 * y)
    o_ref[...] = y.astype(o_ref.dtype)


def _ln_kernel(x_ref, g_ref, b_ref, o_ref, *, eps):
    x = x_ref[...].astype(jnp.float32)
    mean = jnp.mean(x, axis=-1, keepdims=True)
    var = jnp.mean(jnp.square(x - mean), axis=-1, keepdims=True)
    y = (x - mean) * lax.rsqrt(var + eps)
    y = y * g_ref[...].astype(jnp.float32) + b_ref[...].astype(jnp.float32)
    o_ref[...] = y.astype(o_ref.dtype)


def _attn_kernel(qkv_ref, o_ref, out_sc, *, heads, head_dim, valid_len):
    # One batch element per grid step.  qkv_ref: (1, Lp, 3D), o_ref: (1, Lp, D).
    # The 1/sqrt(head_dim) scale is already folded into the QKV projection.
    # TODO(synk): for very long sequences, tile the KV axis flash-style to
    # bound VMEM further on v7x (CLIP's Lp<=584 fits comfortably as-is).
    D = heads * head_dim
    Lp = qkv_ref.shape[1]
    need_mask = valid_len < Lp
    if need_mask:
        key_valid = lax.broadcasted_iota(jnp.int32, (Lp, Lp), 1) < valid_len

    for h in range(heads):                                     # static unroll
        q = qkv_ref[0, :, h * head_dim:(h + 1) * head_dim]
        k = qkv_ref[0, :, D + h * head_dim:D + (h + 1) * head_dim]
        v = qkv_ref[0, :, 2 * D + h * head_dim:2 * D + (h + 1) * head_dim]
        # contract the shared last dim; avoids an explicit k.T relayout.
        s = lax.dot_general(q, k, (((1,), (1,)), ((), ())),
                            preferred_element_type=jnp.float32)  # (Lp, Lp) f32
        if need_mask:
            s = jnp.where(key_valid, s, -1e30)
        m = jnp.max(s, axis=-1, keepdims=True)
        p = jnp.exp(s - m)
        denom = jnp.sum(p, axis=-1, keepdims=True)
        p = p * pl.reciprocal(denom, approx=not EXACT_F32)
        # write this head's result immediately -> short live ranges, no concat
        out_sc[:, h * head_dim:(h + 1) * head_dim] = jnp.dot(
            p.astype(v.dtype), v, preferred_element_type=jnp.float32)

    o_ref[0] = out_sc[...].astype(o_ref.dtype)   # one lane-dense (Lp, D) store


# --------------------------- pallas_call wrappers ---------------------------

def pallas_matmul(x, w, b=None, residual=None, activation=None, out_dtype=None,
                  tm=512, tn=1024, tk=512):
    """Tiled (M,K)@(K,N) with fused bias / QuickGELU / residual epilogue."""
    M, K = x.shape
    K2, N = w.shape
    assert K == K2
    if out_dtype is None:
        out_dtype = x.dtype if residual is None else residual.dtype
    tm = _pick_tile(M, tm, 8)
    tn = _pick_tile(N, tn, 128)
    tk = _pick_tile(K, tk, 128)
    grid = (M // tm, N // tn, K // tk)

    in_specs = [
        pl.BlockSpec((tm, tk), lambda i, j, k: (i, k)),
        pl.BlockSpec((tk, tn), lambda i, j, k: (k, j)),
    ]
    args = [x, w]
    io_alias = {}
    if b is not None:
        in_specs.append(pl.BlockSpec((1, tn), lambda i, j, k: (0, j)))
        args.append(b.reshape(1, N))
    if residual is not None:
        in_specs.append(pl.BlockSpec((tm, tn), lambda i, j, k: (i, j)))
        args.append(residual)
        if residual.dtype == out_dtype and residual.shape == (M, N):
            io_alias = {len(args) - 1: 0}      # residual buffer -> output buffer

    kernel = functools.partial(_mm_kernel, has_bias=b is not None,
                               has_res=residual is not None, act=activation)
    return pl.pallas_call(
        kernel,
        out_shape=jax.ShapeDtypeStruct((M, N), out_dtype),
        grid=grid,
        in_specs=in_specs,
        out_specs=pl.BlockSpec((tm, tn), lambda i, j, k: (i, j)),
        scratch_shapes=[pltpu.VMEM((tm, tn), jnp.float32)],
        input_output_aliases=io_alias,
        compiler_params=pltpu.CompilerParams(
            dimension_semantics=("parallel", "parallel", "arbitrary"),
            vmem_limit_bytes=_VMEM_LIMIT),
    )(*args)


def pallas_ln_matmul(x, gamma, beta, w, b, activation=None, out_dtype=None,
                     tm=512, tn=1024):
    """Fused LayerNorm(x) @ w + b (+ QuickGELU).  K (= feature dim) untiled."""
    M, D = x.shape
    D2, N = w.shape
    assert D == D2
    if out_dtype is None:
        out_dtype = x.dtype
    tm = _pick_tile(M, tm, 8)
    tn = _pick_tile(N, tn, 128)
    grid = (M // tm, N // tn)
    kernel = functools.partial(_ln_mm_kernel, act=activation, eps=1e-5)
    return pl.pallas_call(
        kernel,
        out_shape=jax.ShapeDtypeStruct((M, N), out_dtype),
        grid=grid,
        in_specs=[
            pl.BlockSpec((tm, D), lambda i, j: (i, 0)),
            pl.BlockSpec((1, D), lambda i, j: (0, 0)),
            pl.BlockSpec((1, D), lambda i, j: (0, 0)),
            pl.BlockSpec((D, tn), lambda i, j: (0, j)),
            pl.BlockSpec((1, tn), lambda i, j: (0, j)),
        ],
        out_specs=pl.BlockSpec((tm, tn), lambda i, j: (i, j)),
        scratch_shapes=[pltpu.VMEM((tm, D), w.dtype)],   # cached normalized xn
        compiler_params=pltpu.CompilerParams(
            # j must be "arbitrary": the xn scratch is carried across the N axis.
            dimension_semantics=("parallel", "arbitrary"),
            vmem_limit_bytes=_VMEM_LIMIT),
    )(x, gamma.reshape(1, D), beta.reshape(1, D), w, b.reshape(1, N))


def pallas_layernorm(x, gamma, beta, tm=512):
    M, D = x.shape
    tm = _pick_tile(M, tm, 8)
    kernel = functools.partial(_ln_kernel, eps=1e-5)
    return pl.pallas_call(
        kernel,
        out_shape=jax.ShapeDtypeStruct((M, D), x.dtype),
        grid=(M // tm,),
        in_specs=[
            pl.BlockSpec((tm, D), lambda i: (i, 0)),
            pl.BlockSpec((1, D), lambda i: (0, 0)),
            pl.BlockSpec((1, D), lambda i: (0, 0)),
        ],
        out_specs=pl.BlockSpec((tm, D), lambda i: (i, 0)),
        compiler_params=pltpu.CompilerParams(
            dimension_semantics=("parallel",),
            vmem_limit_bytes=_VMEM_LIMIT),
    )(x, gamma.reshape(1, D), beta.reshape(1, D))


def pallas_attention(qkv, heads, valid_len):
    """qkv: (B, Lp, 3D) packed [q | k | v]; returns (B, Lp, D)."""
    B, Lp, threeD = qkv.shape
    D = threeD // 3
    hd = D // heads
    kernel = functools.partial(_attn_kernel, heads=heads, head_dim=hd,
                               valid_len=valid_len)
    return pl.pallas_call(
        kernel,
        out_shape=jax.ShapeDtypeStruct((B, Lp, D), qkv.dtype),
        grid=(B,),
        in_specs=[pl.BlockSpec((1, Lp, threeD), lambda b: (b, 0, 0))],
        out_specs=pl.BlockSpec((1, Lp, D), lambda b: (b, 0, 0)),
        scratch_shapes=[pltpu.VMEM((Lp, D), jnp.float32)],
        compiler_params=pltpu.CompilerParams(
            dimension_semantics=("parallel",),
            vmem_limit_bytes=_VMEM_LIMIT),
    )(qkv)


# ------------------------------ Model forward -------------------------------

def residual_attention_block(x_flat, p, heads, B, Lp, valid_len):
    # x_flat: (B*Lp, D) f32 residual stream
    D = x_flat.shape[1]

    # --- attention branch: ln_1 fused into QKV projection ---
    qkv = pallas_ln_matmul(x_flat, p["ln1_g"], p["ln1_b"],
                           p["in_proj_wT"], p["in_proj_b"],
                           out_dtype=_COMPUTE_DTYPE)             # (B*Lp, 3D)
    attn = pallas_attention(qkv.reshape(B, Lp, 3 * D), heads, valid_len)
    attn = attn.reshape(B * Lp, D)
    x_flat = pallas_matmul(attn, p["out_proj_wT"], p["out_proj_b"],
                           residual=x_flat)                      # + residual (f32)

    # --- MLP branch: ln_2 fused into c_fc + QuickGELU ---
    h = pallas_ln_matmul(x_flat, p["ln2_g"], p["ln2_b"],
                         p["fc_wT"], p["fc_b"], activation="quick_gelu",
                         out_dtype=_COMPUTE_DTYPE)
    x_flat = pallas_matmul(h, p["proj_wT"], p["proj_b"],
                           residual=x_flat)                      # c_proj + res
    return x_flat


@functools.partial(jax.jit, static_argnames=("patch_size", "heads"))
def clip_forward(params, image, *, patch_size, heads):
    # image: (B, 3, H, W)  NCHW, matching the PyTorch conv input layout.
    B, C, H, W = image.shape
    ps = patch_size
    gh, gw = H // ps, W // ps
    width = params["conv1_wT"].shape[1]
    Kpad = params["conv1_wT"].shape[0]          # K padded to a 128 multiple

    # conv1 (stride == kernel, no bias) == patch extraction + matmul
    patches = image.reshape(B, C, gh, ps, gw, ps)
    patches = patches.transpose(0, 2, 4, 1, 3, 5).reshape(B * gh * gw, C * ps * ps)
    if Kpad != patches.shape[1]:
        patches = jnp.pad(patches, ((0, 0), (0, Kpad - patches.shape[1])))
    x = pallas_matmul(patches, params["conv1_wT"],
                      out_dtype=jnp.float32)                      # (B*P, width)
    x = x.reshape(B, gh * gw, width)

    # prepend class token, add positional embedding
    cls = jnp.broadcast_to(params["class_embedding"].astype(x.dtype), (B, 1, width))
    x = jnp.concatenate([cls, x], axis=1)                         # (B, L, width)
    x = x + params["pos_embedding"].astype(x.dtype)
    L = gh * gw + 1

    # pad token dim to a sublane multiple (8); padded keys are masked in attn
    Lp = (L + 7) // 8 * 8
    if Lp != L:
        x = jnp.pad(x, ((0, 0), (0, Lp - L), (0, 0)))

    x_flat = x.reshape(B * Lp, width)

    # ln_pre
    x_flat = pallas_layernorm(x_flat, params["ln_pre_g"], params["ln_pre_b"])

    # transformer (PyTorch Transformer builds `layers - 1` resblocks)
    for blk in params["blocks"]:
        x_flat = residual_attention_block(x_flat, blk, heads, B, Lp, L)

    # ln_post
    x_flat = pallas_layernorm(x_flat, params["ln_post_g"], params["ln_post_b"])
    return x_flat.reshape(B, Lp, width)[:, :L, :]


# ------------------------------ Parameter init ------------------------------

def init_params(key, *, width, patch_size, layers, heads, resolution_after):
    n_blocks = max(layers - 1, 0)           # Transformer uses range(layers - 1)
    num_patches = (resolution_after // patch_size) ** 2
    head_dim = width // heads
    scale = width ** -0.5
    proj_std = (width ** -0.5) * ((2 * layers) ** -0.5)
    attn_std = width ** -0.5
    fc_std = (2 * width) ** -0.5

    keys = iter(jax.random.split(key, 3 + 4 * max(n_blocks, 1)))

    def normal(shape, std):
        return std * jax.random.normal(next(keys), shape, dtype=jnp.float32)

    # conv1 weight: patchify K dim padded to a 128 multiple (dense lane loads).
    K = 3 * patch_size * patch_size
    Kpad = (K + 127) // 128 * 128
    conv1_w = normal((width, 3, patch_size, patch_size), 0.02)
    conv1_wT = conv1_w.reshape(width, K).T
    if Kpad != K:
        conv1_wT = jnp.pad(conv1_wT, ((0, Kpad - K), (0, 0)))

    params = {
        "conv1_wT": conv1_wT.astype(_COMPUTE_DTYPE),
        "class_embedding": scale * normal((width,), 1.0),
        "pos_embedding": scale * normal((num_patches + 1, width), 1.0),
        "ln_pre_g": jnp.ones((width,), jnp.float32),
        "ln_pre_b": jnp.zeros((width,), jnp.float32),
        "ln_post_g": jnp.ones((width,), jnp.float32),
        "ln_post_b": jnp.zeros((width,), jnp.float32),
        "blocks": [],
    }

    q_scale = head_dim ** -0.5
    for _ in range(n_blocks):
        # Weights are stored PRE-TRANSPOSED (ready for x @ wT); the attention
        # 1/sqrt(head_dim) scale is folded into the Q rows of in_proj.
        w_in = normal((3 * width, width), attn_std)        # (3D, D) like PyTorch
        w_in = w_in.at[:width].multiply(q_scale)
        b_in = jnp.zeros((3 * width,), jnp.float32)
        b_in = b_in.at[:width].multiply(q_scale)           # no-op on zeros
        params["blocks"].append({
            "ln1_g": jnp.ones((width,), jnp.float32),
            "ln1_b": jnp.zeros((width,), jnp.float32),
            "in_proj_wT": w_in.T.astype(_COMPUTE_DTYPE),                     # (D, 3D)
            "in_proj_b": b_in,
            "out_proj_wT": normal((width, width), proj_std).T.astype(_COMPUTE_DTYPE),
            "out_proj_b": jnp.zeros((width,), jnp.float32),
            "ln2_g": jnp.ones((width,), jnp.float32),
            "ln2_b": jnp.zeros((width,), jnp.float32),
            "fc_wT": normal((4 * width, width), fc_std).T.astype(_COMPUTE_DTYPE),
            "fc_b": jnp.zeros((4 * width,), jnp.float32),
            "proj_wT": normal((width, 4 * width), proj_std).T.astype(_COMPUTE_DTYPE),
            "proj_b": jnp.zeros((width,), jnp.float32),
        })
    return params


# ----------------------------------- Main ------------------------------------

if __name__ == "__main__":
    # Small CLIP visual config: 16x16 image, 8x8 patches -> 4 patches + cls = 5 tokens.
    # width is a 128 multiple so all lane dims are dense; head_dim = 64 as in CLIP.
    B = 2
    image_resolution = 16
    resolution_after = 16
    vision_patch_size = 8
    vision_width = 128
    vision_layers = 3                      # -> 2 residual attention blocks
    vision_heads = vision_width // 64      # = 2

    key = jax.random.PRNGKey(0)
    k_img, k_par = jax.random.split(key)
    image = jax.random.normal(k_img, (B, 3, image_resolution, image_resolution),
                              dtype=jnp.float32)

    params = init_params(k_par, width=vision_width, patch_size=vision_patch_size,
                         layers=vision_layers, heads=vision_heads,
                         resolution_after=resolution_after)

    # TODO(synk): text branch (token_embedding / positional_embedding / ln_final)
    # is unused in CLIP.forward and not instantiated here.
    out = clip_forward(params, image, patch_size=vision_patch_size, heads=vision_heads)
    out = jax.block_until_ready(out)

    num_patches = (image_resolution // vision_patch_size) ** 2
    assert out.shape == (B, num_patches + 1, vision_width), out.shape
    assert bool(jnp.all(jnp.isfinite(out)))
    print("KERNEL_OK")
</pallas_src>

<mosaic_0001>
module attributes {stable_mosaic.version = 11 : i64} {
  func.func @_attn_kernel(%arg0: i32, %arg1: memref<1x8x384xbf16, #tpu.memory_space<vmem>>, %arg2: memref<1x8x128xbf16, #tpu.memory_space<vmem>>, %arg3: memref<8x128xf32, #tpu.memory_space<vmem>>) attributes {dimension_semantics = [#tpu.dimension_semantics<parallel>], iteration_bounds = array<i64: 2>, scalar_prefetch = 0 : i64, scratch_operands = 1 : i64, tpu.core_type = #tpu.core_type<tc>, window_params = [{transform_indices = @transform_0, window_bounds = array<i64: 1, 8, 384>}, {transform_indices = @transform_1, window_bounds = array<i64: 1, 8, 128>}]} {
    %0 = tpu.iota {dimensions = array<i32: 1>} : vector<8x8xi32>
    %c5_i32 = arith.constant 5 : i32
    %1 = vector.broadcast %c5_i32 : i32 to vector<8x8xi32>
    %2 = arith.cmpi slt, %0, %1 : vector<8x8xi32>
    %c0 = arith.constant 0 : index
    %c0_0 = arith.constant 0 : index
    %c0_1 = arith.constant 0 : index
    %3 = vector.load %arg1[%c0, %c0_0, %c0_1] : memref<1x8x384xbf16, #tpu.memory_space<vmem>>, vector<1x8x64xbf16>
    %4 = vector.shape_cast %3 : vector<1x8x64xbf16> to vector<8x64xbf16>
    %c0_2 = arith.constant 0 : index
    %c0_3 = arith.constant 0 : index
    %c128 = arith.constant 128 : index
    %5 = vector.load %arg1[%c0_2, %c0_3, %c128] : memref<1x8x384xbf16, #tpu.memory_space<vmem>>, vector<1x8x64xbf16>
    %6 = vector.shape_cast %5 : vector<1x8x64xbf16> to vector<8x64xbf16>
    %c0_4 = arith.constant 0 : index
    %c0_5 = arith.constant 0 : index
    %c256 = arith.constant 256 : index
    %7 = vector.load %arg1[%c0_4, %c0_5, %c256] : memref<1x8x384xbf16, #tpu.memory_space<vmem>>, vector<1x8x64xbf16>
    %8 = vector.shape_cast %7 : vector<1x8x64xbf16> to vector<8x64xbf16>
    %cst = arith.constant dense<0.000000e+00> : vector<8x8xf32>
    %9 = tpu.matmul %4, %6, %cst {dimension_numbers = #tpu.dot_dimension_numbers<[1], [1], [0], [0], [0, 0, 1, 0], [], []>} : vector<8x64xbf16>, vector<8x64xbf16>, vector<8x8xf32> -> vector<8x8xf32>
    %cst_6 = arith.constant -1.000000e+30 : f32
    %10 = vector.broadcast %cst_6 : f32 to vector<8x8xf32>
    %11 = arith.select %2, %9, %10 : vector<8x8xi1>, vector<8x8xf32>
    %cst_7 = arith.constant dense<0xFF800000> : vector<8xf32>
    %12 = vector.multi_reduction <maximumf>, %11, %cst_7 [1] : vector<8x8xf32> to vector<8xf32>
    %13 = vector.shape_cast %12 : vector<8xf32> to vector<8x1xf32>
    %14 = vector.broadcast %13 : vector<8x1xf32> to vector<8x8xf32>
    %15 = arith.subf %11, %14 : vector<8x8xf32>
    %16 = math.exp %15 : vector<8x8xf32>
    %cst_8 = arith.constant dense<0.000000e+00> : vector<8xf32>
    %17 = vector.multi_reduction <add>, %16, %cst_8 [1] : vector<8x8xf32> to vector<8xf32>
    %18 = vector.shape_cast %17 : vector<8xf32> to vector<8x1xf32>
    %19 = tpu.reciprocal %18 {approx = true} : vector<8x1xf32> -> vector<8x1xf32>
    %20 = vector.broadcast %19 : vector<8x1xf32> to vector<8x8xf32>
    %21 = arith.mulf %16, %20 : vector<8x8xf32>
    %22 = arith.truncf %21 : vector<8x8xf32> to vector<8x8xbf16>
    %cst_9 = arith.constant dense<0.000000e+00> : vector<8x64xf32>
    %23 = tpu.matmul %22, %8, %cst_9 {dimension_numbers = #tpu.dot_dimension_numbers<[1], [0], [0], [1], [0, 0, 1, 1], [], []>} : vector<8x8xbf16>, vector<8x64xbf16>, vector<8x64xf32> -> vector<8x64xf32>
    %c0_10 = arith.constant 0 : index
    %c0_11 = arith.constant 0 : index
    %24 = vector.load %arg3[%c0_10, %c0_11] : memref<8x128xf32, #tpu.memory_space<vmem>>, vector<8x64xf32>
    tpu.vector_store %arg3[%c0_10, %c0_11], %23 {strides = array<i32>} : memref<8x128xf32, #tpu.memory_space<vmem>>, vector<8x64xf32>,
    %c0_12 = arith.constant 0 : index
    %c0_13 = arith.constant 0 : index
    %c64 = arith.constant 64 : index
    %25 = vector.load %arg1[%c0_12, %c0_13, %c64] : memref<1x8x384xbf16, #tpu.memory_space<vmem>>, vector<1x8x64xbf16>
    %26 = vector.shape_cast %25 : vector<1x8x64xbf16> to vector<8x64xbf16>
    %c0_14 = arith.constant 0 : index
    %c0_15 = arith.constant 0 : index
    %c192 = arith.constant 192 : index
    %27 = vector.load %arg1[%c0_14, %c0_15, %c192] : memref<1x8x384xbf16, #tpu.memory_space<vmem>>, vector<1x8x64xbf16>
    %28 = vector.shape_cast %27 : vector<1x8x64xbf16> to vector<8x64xbf16>
    %c0_16 = arith.constant 0 : index
    %c0_17 = arith.constant 0 : index
    %c320 = arith.constant 320 : index
    %29 = vector.load %arg1[%c0_16, %c0_17, %c320] : memref<1x8x384xbf16, #tpu.memory_space<vmem>>, vector<1x8x64xbf16>
    %30 = vector.shape_cast %29 : vector<1x8x64xbf16> to vector<8x64xbf16>
    %cst_18 = arith.constant dense<0.000000e+00> : vector<8x8xf32>
    %31 = tpu.matmul %26, %28, %cst_18 {dimension_numbers = #tpu.dot_dimension_numbers<[1], [1], [0], [0], [0, 0, 1, 0], [], []>} : vector<8x64xbf16>, vector<8x64xbf16>, vector<8x8xf32> -> vector<8x8xf32>
    %cst_19 = arith.constant -1.000000e+30 : f32
    %32 = vector.broadcast %cst_19 : f32 to vector<8x8xf32>
    %33 = arith.select %2, %31, %32 : vector<8x8xi1>, vector<8x8xf32>
    %cst_20 = arith.constant dense<0xFF800000> : vector<8xf32>
    %34 = vector.multi_reduction <maximumf>, %33, %cst_20 [1] : vector<8x8xf32> to vector<8xf32>
    %35 = vector.shape_cast %34 : vector<8xf32> to vector<8x1xf32>
    %36 = vector.broadcast %35 : vector<8x1xf32> to vector<8x8xf32>
    %37 = arith.subf %33, %36 : vector<8x8xf32>
    %38 = math.exp %37 : vector<8x8xf32>
    %cst_21 = arith.constant dense<0.000000e+00> : vector<8xf32>
    %39 = vector.multi_reduction <add>, %38, %cst_21 [1] : vector<8x8xf32> to vector<8xf32>
    %40 = vector.shape_cast %39 : vector<8xf32> to vector<8x1xf32>
    %41 = tpu.reciprocal %40 {approx = true} : vector<8x1xf32> -> vector<8x1xf32>
    %42 = vector.broadcast %41 : vector<8x1xf32> to vector<8x8xf32>
    %43 = arith.mulf %38, %42 : vector<8x8xf32>
    %44 = arith.truncf %43 : vector<8x8xf32> to vector<8x8xbf16>
    %cst_22 = arith.constant dense<0.000000e+00> : vector<8x64xf32>
    %45 = tpu.matmul %44, %30, %cst_22 {dimension_numbers = #tpu.dot_dimension_numbers<[1], [0], [0], [1], [0, 0, 1, 1], [], []>} : vector<8x8xbf16>, vector<8x64xbf16>, vector<8x64xf32> -> vector<8x64xf32>
    %c0_23 = arith.constant 0 : index
    %c64_24 = arith.constant 64 : index
    %46 = vector.load %arg3[%c0_23, %c64_24] : memref<8x128xf32, #tpu.memory_space<vmem>>, vector<8x64xf32>
    tpu.vector_store %arg3[%c0_23, %c64_24], %45 {strides = array<i32>} : memref<8x128xf32, #tpu.memory_space<vmem>>, vector<8x64xf32>,
    %c0_25 = arith.constant 0 : index
    %c0_26 = arith.constant 0 : index
    %47 = vector.load %arg3[%c0_25, %c0_26] : memref<8x128xf32, #tpu.memory_space<vmem>>, vector<8x128xf32>
    %48 = arith.truncf %47 : vector<8x128xf32> to vector<8x128xbf16>
    %c0_27 = arith.constant 0 : index
    %c0_28 = arith.constant 0 : index
    %c0_29 = arith.constant 0 : index
    %49 = vector.load %arg2[%c0_27, %c0_28, %c0_29] : memref<1x8x128xbf16, #tpu.memory_space<vmem>>, vector<1x8x128xbf16>
    %50 = vector.shape_cast %49 : vector<1x8x128xbf16> to vector<8x128xbf16>
    %51 = vector.shape_cast %48 : vector<8x128xbf16> to vector<1x8x128xbf16>
    tpu.vector_store %arg2[%c0_27, %c0_28, %c0_29], %51 {strides = array<i32>} : memref<1x8x128xbf16, #tpu.memory_space<vmem>>, vector<1x8x128xbf16>,
    return
  }
  func.func @transform_0(%arg0: i32) -> (i32, i32, i32) {
    %c0_i32 = arith.constant 0 : i32
    %c0_i32_0 = arith.constant 0 : i32
    %c0_i32_1 = arith.constant 0 : i32
    return %arg0, %c0_i32, %c0_i32_0 : i32, i32, i32
  }
  func.func @transform_1(%arg0: i32) -> (i32, i32, i32) {
    %c0_i32 = arith.constant 0 : i32
    %c0_i32_0 = arith.constant 0 : i32
    %c0_i32_1 = arith.constant 0 : i32
    return %arg0, %c0_i32, %c0_i32_0 : i32, i32, i32
  }
}

module attributes {stable_mosaic.version = 11 : i64} {
  func.func @_mm_kernel(%arg0: i32, %arg1: i32, %arg2: i32, %arg3: memref<8x256xf32, #tpu.memory_space<vmem>>, %arg4: memref<256x128xbf16, #tpu.memory_space<vmem>>, %arg5: memref<8x128xf32, #tpu.memory_space<vmem>>, %arg6: memref<8x128xf32, #tpu.memory_space<vmem>>) attributes {dimension_semantics = [#tpu.dimension_semantics<parallel>, #tpu.dimension_semantics<parallel>, #tpu.dimension_semantics<arbitrary>], iteration_bounds = array<i64: 1, 1, 1>, scalar_prefetch = 0 : i64, scratch_operands = 1 : i64, tpu.core_type = #tpu.core_type<tc>, window_params = [{transform_indices = @transform_0, window_bounds = array<i64: 8, 256>}, {transform_indices = @transform_1, window_bounds = array<i64: 256, 128>}, {transform_indices = @transform_2, window_bounds = array<i64: 8, 128>}]} {
    %c0_i32 = arith.constant 0 : i32
    %0 = arith.cmpi eq, %arg2, %c0_i32 : i32
    %1 = arith.extui %0 : i1 to i32
    %c0_i32_0 = arith.constant 0 : i32
    %2 = arith.cmpi ne, %1, %c0_i32_0 : i32
    scf.if %2 {
      %cst_10 = arith.constant 0.000000e+00 : f32
      %13 = vector.broadcast %cst_10 : f32 to vector<8x128xf32>
      %c0_11 = arith.constant 0 : index
      %c0_12 = arith.constant 0 : index
      %14 = vector.load %arg6[%c0_11, %c0_12] : memref<8x128xf32, #tpu.memory_space<vmem>>, vector<8x128xf32>
      tpu.vector_store %arg6[%c0_11, %c0_12], %13 {strides = array<i32>} : memref<8x128xf32, #tpu.memory_space<vmem>>, vector<8x128xf32>,
    } else {
    }
    %c0 = arith.constant 0 : index
    %c0_1 = arith.constant 0 : index
    %3 = vector.load %arg6[%c0, %c0_1] : memref<8x128xf32, #tpu.memory_space<vmem>>, vector<8x128xf32>
    %c0_2 = arith.constant 0 : index
    %c0_3 = arith.constant 0 : index
    %4 = vector.load %arg3[%c0_2, %c0_3] : memref<8x256xf32, #tpu.memory_space<vmem>>, vector<8x256xf32>
    %5 = arith.truncf %4 : vector<8x256xf32> to vector<8x256xbf16>
    %c0_4 = arith.constant 0 : index
    %c0_5 = arith.constant 0 : index
    %6 = vector.load %arg4[%c0_4, %c0_5] : memref<256x128xbf16, #tpu.memory_space<vmem>>, vector<256x128xbf16>
    %cst = arith.constant dense<0.000000e+00> : vector<8x128xf32>
    %7 = tpu.matmul %5, %6, %cst {dimension_numbers = #tpu.dot_dimension_numbers<[1], [0], [0], [1], [0, 0, 1, 1], [], []>} : vector<8x256xbf16>, vector<256x128xbf16>, vector<8x128xf32> -> vector<8x128xf32>
    %8 = arith.addf %3, %7 : vector<8x128xf32>
    %c0_6 = arith.constant 0 : index
    %c0_7 = arith.constant 0 : index
    %9 = vector.load %arg6[%c0_6, %c0_7] : memref<8x128xf32, #tpu.memory_space<vmem>>, vector<8x128xf32>
    tpu.vector_store %arg6[%c0_6, %c0_7], %8 {strides = array<i32>} : memref<8x128xf32, #tpu.memory_space<vmem>>, vector<8x128xf32>,
    %c0_i32_8 = arith.constant 0 : i32
    %10 = arith.cmpi eq, %arg2, %c0_i32_8 : i32
    %11 = arith.extui %10 : i1 to i32
    %c0_i32_9 = arith.constant 0 : i32
    %12 = arith.cmpi ne, %11, %c0_i32_9 : i32
    scf.if %12 {
      %c0_10 = arith.constant 0 : index
      %c0_11 = arith.constant 0 : index
      %13 = vector.load %arg6[%c0_10, %c0_11] : memref<8x128xf32, #tpu.memory_space<vmem>>, vector<8x128xf32>
      %c0_12 = arith.constant 0 : index
      %c0_13 = arith.constant 0 : index
      %14 = vector.load %arg5[%c0_12, %c0_13] : memref<8x128xf32, #tpu.memory_space<vmem>>, vector<8x128xf32>
      tpu.vector_store %arg5[%c0_12, %c0_13], %13 {strides = array<i32>} : memref<8x128xf32, #tpu.memory_space<vmem>>, vector<8x128xf32>,
    } else {
    }
    return
  }
  func.func @transform_0(%arg0: i32, %arg1: i32, %arg2: i32) -> (i32, i32) {
    %c0_i32 = arith.constant 0 : i32
    return %arg0, %arg2 : i32, i32
  }
  func.func @transform_1(%arg0: i32, %arg1: i32, %arg2: i32) -> (i32, i32) {
    %c0_i32 = arith.constant 0 : i32
    return %arg2, %arg1 : i32, i32
  }
  func.func @transform_2(%arg0: i32, %arg1: i32, %arg2: i32) -> (i32, i32) {
    %c0_i32 = arith.constant 0 : i32
    return %arg0, %arg1 : i32, i32
  }
}

module attributes {stable_mosaic.version = 11 : i64} {
  func.func @_ln_kernel(%arg0: i32, %arg1: memref<16x128xf32, #tpu.memory_space<vmem>>, %arg2: memref<1x128xf32, #tpu.memory_space<vmem>>, %arg3: memref<1x128xf32, #tpu.memory_space<vmem>>, %arg4: memref<16x128xf32, #tpu.memory_space<vmem>>) attributes {dimension_semantics = [#tpu.dimension_semantics<parallel>], iteration_bounds = array<i64: 1>, scalar_prefetch = 0 : i64, scratch_operands = 0 : i64, tpu.core_type = #tpu.core_type<tc>, window_params = [{transform_indices = @transform_0, window_bounds = array<i64: 16, 128>}, {pipeline_mode = #tpu.pipeline_mode<synchronous>, transform_indices = @transform_1, window_bounds = array<i64: 1, 128>}, {pipeline_mode = #tpu.pipeline_mode<synchronous>, transform_indices = @transform_2, window_bounds = array<i64: 1, 128>}, {transform_indices = @transform_3, window_bounds = array<i64: 16, 128>}]} {
    %c0 = arith.constant 0 : index
    %c0_0 = arith.constant 0 : index
    %0 = vector.load %arg1[%c0, %c0_0] : memref<16x128xf32, #tpu.memory_space<vmem>>, vector<16x128xf32>
    %cst = arith.constant dense<0.000000e+00> : vector<16xf32>
    %1 = vector.multi_reduction <add>, %0, %cst [1] : vector<16x128xf32> to vector<16xf32>
    %2 = vector.shape_cast %1 : vector<16xf32> to vector<16x1xf32>
    %cst_1 = arith.constant 1.280000e+02 : f32
    %3 = vector.broadcast %cst_1 : f32 to vector<16x1xf32>
    %4 = arith.divf %2, %3 : vector<16x1xf32>
    %5 = vector.broadcast %4 : vector<16x1xf32> to vector<16x128xf32>
    %6 = arith.subf %0, %5 : vector<16x128xf32>
    %7 = arith.mulf %6, %6 : vector<16x128xf32>
    %cst_2 = arith.constant dense<0.000000e+00> : vector<16xf32>
    %8 = vector.multi_reduction <add>, %7, %cst_2 [1] : vector<16x128xf32> to vector<16xf32>
    %9 = vector.shape_cast %8 : vector<16xf32> to vector<16x1xf32>
    %cst_3 = arith.constant 1.280000e+02 : f32
    %10 = vector.broadcast %cst_3 : f32 to vector<16x1xf32>
    %11 = arith.divf %9, %10 : vector<16x1xf32>
    %12 = vector.broadcast %4 : vector<16x1xf32> to vector<16x128xf32>
    %13 = arith.subf %0, %12 : vector<16x128xf32>
    %cst_4 = arith.constant 9.99999974E-6 : f32
    %14 = vector.broadcast %cst_4 : f32 to vector<16x1xf32>
    %15 = arith.addf %11, %14 : vector<16x1xf32>
    %16 = math.rsqrt %15 : vector<16x1xf32>
    %17 = vector.broadcast %16 : vector<16x1xf32> to vector<16x128xf32>
    %18 = arith.mulf %13, %17 : vector<16x128xf32>
    %c0_5 = arith.constant 0 : index
    %c0_6 = arith.constant 0 : index
    %19 = vector.load %arg2[%c0_5, %c0_6] : memref<1x128xf32, #tpu.memory_space<vmem>>, vector<1x128xf32>
    %20 = vector.broadcast %19 : vector<1x128xf32> to vector<16x128xf32>
    %21 = arith.mulf %18, %20 : vector<16x128xf32>
    %c0_7 = arith.constant 0 : index
    %c0_8 = arith.constant 0 : index
    %22 = vector.load %arg3[%c0_7, %c0_8] : memref<1x128xf32, #tpu.memory_space<vmem>>, vector<1x128xf32>
    %23 = vector.broadcast %22 : vector<1x128xf32> to vector<16x128xf32>
    %24 = arith.addf %21, %23 : vector<16x128xf32>
    %c0_9 = arith.constant 0 : index
    %c0_10 = arith.constant 0 : index
    %25 = vector.load %arg4[%c0_9, %c0_10] : memref<16x128xf32, #tpu.memory_space<vmem>>, vector<16x128xf32>
    tpu.vector_store %arg4[%c0_9, %c0_10], %24 {strides = array<i32>} : memref<16x128xf32, #tpu.memory_space<vmem>>, vector<16x128xf32>,
    return
  }
  func.func @transform_0(%arg0: i32) -> (i32, i32) {
    %c0_i32 = arith.constant 0 : i32
    %c0_i32_0 = arith.constant 0 : i32
    return %arg0, %c0_i32 : i32, i32
  }
  func.func @transform_1(%arg0: i32) -> (i32, i32) {
    %c0_i32 = arith.constant 0 : i32
    %c0_i32_0 = arith.constant 0 : i32
    %c0_i32_1 = arith.constant 0 : i32
    return %c0_i32, %c0_i32_0 : i32, i32
  }
  func.func @transform_2(%arg0: i32) -> (i32, i32) {
    %c0_i32 = arith.constant 0 : i32
    %c0_i32_0 = arith.constant 0 : i32
    %c0_i32_1 = arith.constant 0 : i32
    return %c0_i32, %c0_i32_0 : i32, i32
  }
  func.func @transform_3(%arg0: i32) -> (i32, i32) {
    %c0_i32 = arith.constant 0 : i32
    %c0_i32_0 = arith.constant 0 : i32
    return %arg0, %c0_i32 : i32, i32
  }
}

module attributes {stable_mosaic.version = 11 : i64} {
  func.func @_ln_mm_kernel(%arg0: i32, %arg1: i32, %arg2: memref<16x128xf32, #tpu.memory_space<vmem>>, %arg3: memref<1x128xf32, #tpu.memory_space<vmem>>, %arg4: memref<1x128xf32, #tpu.memory_space<vmem>>, %arg5: memref<128x384xbf16, #tpu.memory_space<vmem>>, %arg6: memref<1x384xf32, #tpu.memory_space<vmem>>, %arg7: memref<16x384xbf16, #tpu.memory_space<vmem>>, %arg8: memref<16x128xbf16, #tpu.memory_space<vmem>>) attributes {dimension_semantics = [#tpu.dimension_semantics<parallel>, #tpu.dimension_semantics<arbitrary>], iteration_bounds = array<i64: 1, 1>, scalar_prefetch = 0 : i64, scratch_operands = 1 : i64, tpu.core_type = #tpu.core_type<tc>, window_params = [{transform_indices = @transform_0, window_bounds = array<i64: 16, 128>}, {pipeline_mode = #tpu.pipeline_mode<synchronous>, transform_indices = @transform_1, window_bounds = array<i64: 1, 128>}, {pipeline_mode = #tpu.pipeline_mode<synchronous>, transform_indices = @transform_2, window_bounds = array<i64: 1, 128>}, {transform_indices = @transform_3, window_bounds = array<i64: 128, 384>}, {transform_indices = @transform_4, window_bounds = array<i64: 1, 384>}, {transform_indices = @transform_5, window_bounds = array<i64: 16, 384>}]} {
    %c0_i32 = arith.constant 0 : i32
    %0 = arith.cmpi eq, %arg1, %c0_i32 : i32
    %1 = arith.extui %0 : i1 to i32
    %c0_i32_0 = arith.constant 0 : i32
    %2 = arith.cmpi ne, %1, %c0_i32_0 : i32
    scf.if %2 {
      %c0_8 = arith.constant 0 : index
      %c0_9 = arith.constant 0 : index
      %11 = vector.load %arg2[%c0_8, %c0_9] : memref<16x128xf32, #tpu.memory_space<vmem>>, vector<16x128xf32>
      %cst_10 = arith.constant dense<0.000000e+00> : vector<16xf32>
      %12 = vector.multi_reduction <add>, %11, %cst_10 [1] : vector<16x128xf32> to vector<16xf32>
      %13 = vector.shape_cast %12 : vector<16xf32> to vector<16x1xf32>
      %cst_11 = arith.constant 1.280000e+02 : f32
      %14 = vector.broadcast %cst_11 : f32 to vector<16x1xf32>
      %15 = arith.divf %13, %14 : vector<16x1xf32>
      %16 = vector.broadcast %15 : vector<16x1xf32> to vector<16x128xf32>
      %17 = arith.subf %11, %16 : vector<16x128xf32>
      %18 = arith.mulf %17, %17 : vector<16x128xf32>
      %cst_12 = arith.constant dense<0.000000e+00> : vector<16xf32>
      %19 = vector.multi_reduction <add>, %18, %cst_12 [1] : vector<16x128xf32> to vector<16xf32>
      %20 = vector.shape_cast %19 : vector<16xf32> to vector<16x1xf32>
      %cst_13 = arith.constant 1.280000e+02 : f32
      %21 = vector.broadcast %cst_13 : f32 to vector<16x1xf32>
      %22 = arith.divf %20, %21 : vector<16x1xf32>
      %23 = vector.broadcast %15 : vector<16x1xf32> to vector<16x128xf32>
      %24 = arith.subf %11, %23 : vector<16x128xf32>
      %cst_14 = arith.constant 9.99999974E-6 : f32
      %25 = vector.broadcast %cst_14 : f32 to vector<16x1xf32>
      %26 = arith.addf %22, %25 : vector<16x1xf32>
      %27 = math.rsqrt %26 : vector<16x1xf32>
      %28 = vector.broadcast %27 : vector<16x1xf32> to vector<16x128xf32>
      %29 = arith.mulf %24, %28 : vector<16x128xf32>
      %c0_15 = arith.constant 0 : index
      %c0_16 = arith.constant 0 : index
      %30 = vector.load %arg3[%c0_15, %c0_16] : memref<1x128xf32, #tpu.memory_space<vmem>>, vector<1x128xf32>
      %31 = vector.broadcast %30 : vector<1x128xf32> to vector<16x128xf32>
      %32 = arith.mulf %29, %31 : vector<16x128xf32>
      %c0_17 = arith.constant 0 : index
      %c0_18 = arith.constant 0 : index
      %33 = vector.load %arg4[%c0_17, %c0_18] : memref<1x128xf32, #tpu.memory_space<vmem>>, vector<1x128xf32>
      %34 = vector.broadcast %33 : vector<1x128xf32> to vector<16x128xf32>
      %35 = arith.addf %32, %34 : vector<16x128xf32>
      %36 = arith.truncf %35 : vector<16x128xf32> to vector<16x128xbf16>
      %c0_19 = arith.constant 0 : index
      %c0_20 = arith.constant 0 : index
      %37 = vector.load %arg8[%c0_19, %c0_20] : memref<16x128xbf16, #tpu.memory_space<vmem>>, vector<16x128xbf16>
      tpu.vector_store %arg8[%c0_19, %c0_20], %36 {strides = array<i32>} : memref<16x128xbf16, #tpu.memory_space<vmem>>, vector<16x128xbf16>,
    } else {
    }
    %c0 = arith.constant 0 : index
    %c0_1 = arith.constant 0 : index
    %3 = vector.load %arg8[%c0, %c0_1] : memref<16x128xbf16, #tpu.memory_space<vmem>>, vector<16x128xbf16>
    %c0_2 = arith.constant 0 : index
    %c0_3 = arith.constant 0 : index
    %4 = vector.load %arg5[%c0_2, %c0_3] : memref<128x384xbf16, #tpu.memory_space<vmem>>, vector<128x384xbf16>
    %cst = arith.constant dense<0.000000e+00> : vector<16x384xf32>
    %5 = tpu.matmul %3, %4, %cst {dimension_numbers = #tpu.dot_dimension_numbers<[1], [0], [0], [1], [0, 0, 1, 1], [], []>} : vector<16x128xbf16>, vector<128x384xbf16>, vector<16x384xf32> -> vector<16x384xf32>
    %c0_4 = arith.constant 0 : index
    %c0_5 = arith.constant 0 : index
    %6 = vector.load %arg6[%c0_4, %c0_5] : memref<1x384xf32, #tpu.memory_space<vmem>>, vector<1x384xf32>
    %7 = vector.broadcast %6 : vector<1x384xf32> to vector<16x384xf32>
    %8 = arith.addf %5, %7 : vector<16x384xf32>
    %9 = arith.truncf %8 : vector<16x384xf32> to vector<16x384xbf16>
    %c0_6 = arith.constant 0 : index
    %c0_7 = arith.constant 0 : index
    %10 = vector.load %arg7[%c0_6, %c0_7] : memref<16x384xbf16, #tpu.memory_space<vmem>>, vector<16x384xbf16>
    tpu.vector_store %arg7[%c0_6, %c0_7], %9 {strides = array<i32>} : memref<16x384xbf16, #tpu.memory_space<vmem>>, vector<16x384xbf16>,
    return
  }
  func.func @transform_0(%arg0: i32, %arg1: i32) -> (i32, i32) {
    %c0_i32 = arith.constant 0 : i32
    %c0_i32_0 = arith.constant 0 : i32
    return %arg0, %c0_i32 : i32, i32
  }
  func.func @transform_1(%arg0: i32, %arg1: i32) -> (i32, i32) {
    %c0_i32 = arith.constant 0 : i32
    %c0_i32_0 = arith.constant 0 : i32
    %c0_i32_1 = arith.constant 0 : i32
    return %c0_i32, %c0_i32_0 : i32, i32
  }
  func.func @transform_2(%arg0: i32, %arg1: i32) -> (i32, i32) {
    %c0_i32 = arith.constant 0 : i32
    %c0_i32_0 = arith.constant 0 : i32
    %c0_i32_1 = arith.constant 0 : i32
    return %c0_i32, %c0_i32_0 : i32, i32
  }
  func.func @transform_3(%arg0: i32, %arg1: i32) -> (i32, i32) {
    %c0_i32 = arith.constant 0 : i32
    %c0_i32_0 = arith.constant 0 : i32
    return %c0_i32, %arg1 : i32, i32
  }
  func.func @transform_4(%arg0: i32, %arg1: i32) -> (i32, i32) {
    %c0_i32 = arith.constant 0 : i32
    %c0_i32_0 = arith.constant 0 : i32
    return %c0_i32, %arg1 : i32, i32
  }
  func.func @transform_5(%arg0: i32, %arg1: i32) -> (i32, i32) {
    %c0_i32 = arith.constant 0 : i32
    return %arg0, %arg1 : i32, i32
  }
}

module attributes {stable_mosaic.version = 11 : i64} {
  func.func @_mm_kernel(%arg0: i32, %arg1: i32, %arg2: i32, %arg3: memref<16x128xbf16, #tpu.memory_space<vmem>>, %arg4: memref<128x128xbf16, #tpu.memory_space<vmem>>, %arg5: memref<1x128xf32, #tpu.memory_space<vmem>>, %arg6: memref<16x128xf32, #tpu.memory_space<vmem>>, %arg7: memref<16x128xf32, #tpu.memory_space<vmem>>, %arg8: memref<16x128xf32, #tpu.memory_space<vmem>>) attributes {dimension_semantics = [#tpu.dimension_semantics<parallel>, #tpu.dimension_semantics<parallel>, #tpu.dimension_semantics<arbitrary>], iteration_bounds = array<i64: 1, 1, 1>, scalar_prefetch = 0 : i64, scratch_operands = 1 : i64, tpu.core_type = #tpu.core_type<tc>, window_params = [{transform_indices = @transform_0, window_bounds = array<i64: 16, 128>}, {transform_indices = @transform_1, window_bounds = array<i64: 128, 128>}, {transform_indices = @transform_2, window_bounds = array<i64: 1, 128>}, {transform_indices = @transform_3, window_bounds = array<i64: 16, 128>}, {transform_indices = @transform_4, window_bounds = array<i64: 16, 128>}]} {
    %c0_i32 = arith.constant 0 : i32
    %0 = arith.cmpi eq, %arg2, %c0_i32 : i32
    %1 = arith.extui %0 : i1 to i32
    %c0_i32_0 = arith.constant 0 : i32
    %2 = arith.cmpi ne, %1, %c0_i32_0 : i32
    scf.if %2 {
      %c0_10 = arith.constant 0 : index
      %c0_11 = arith.constant 0 : index
      %12 = vector.load %arg6[%c0_10, %c0_11] : memref<16x128xf32, #tpu.memory_space<vmem>>, vector<16x128xf32>
      %c0_12 = arith.constant 0 : index
      %c0_13 = arith.constant 0 : index
      %13 = vector.load %arg8[%c0_12, %c0_13] : memref<16x128xf32, #tpu.memory_space<vmem>>, vector<16x128xf32>
      tpu.vector_store %arg8[%c0_12, %c0_13], %12 {strides = array<i32>} : memref<16x128xf32, #tpu.memory_space<vmem>>, vector<16x128xf32>,
    } else {
    }
    %c0 = arith.constant 0 : index
    %c0_1 = arith.constant 0 : index
    %3 = vector.load %arg8[%c0, %c0_1] : memref<16x128xf32, #tpu.memory_space<vmem>>, vector<16x128xf32>
    %c0_2 = arith.constant 0 : index
    %c0_3 = arith.constant 0 : index
    %4 = vector.load %arg3[%c0_2, %c0_3] : memref<16x128xbf16, #tpu.memory_space<vmem>>, vector<16x128xbf16>
    %c0_4 = arith.constant 0 : index
    %c0_5 = arith.constant 0 : index
    %5 = vector.load %arg4[%c0_4, %c0_5] : memref<128x128xbf16, #tpu.memory_space<vmem>>, vector<128x128xbf16>
    %cst = arith.constant dense<0.000000e+00> : vector<16x128xf32>
    %6 = tpu.matmul %4, %5, %cst {dimension_numbers = #tpu.dot_dimension_numbers<[1], [0], [0], [1], [0, 0, 1, 1], [], []>} : vector<16x128xbf16>, vector<128x128xbf16>, vector<16x128xf32> -> vector<16x128xf32>
    %7 = arith.addf %3, %6 : vector<16x128xf32>
    %c0_6 = arith.constant 0 : index
    %c0_7 = arith.constant 0 : index
    %8 = vector.load %arg8[%c0_6, %c0_7] : memref<16x128xf32, #tpu.memory_space<vmem>>, vector<16x128xf32>
    tpu.vector_store %arg8[%c0_6, %c0_7], %7 {strides = array<i32>} : memref<16x128xf32, #tpu.memory_space<vmem>>, vector<16x128xf32>,
    %c0_i32_8 = arith.constant 0 : i32
    %9 = arith.cmpi eq, %arg2, %c0_i32_8 : i32
    %10 = arith.extui %9 : i1 to i32
    %c0_i32_9 = arith.constant 0 : i32
    %11 = arith.cmpi ne, %10, %c0_i32_9 : i32
    scf.if %11 {
      %c0_10 = arith.constant 0 : index
      %c0_11 = arith.constant 0 : index
      %12 = vector.load %arg8[%c0_10, %c0_11] : memref<16x128xf32, #tpu.memory_space<vmem>>, vector<16x128xf32>
      %c0_12 = arith.constant 0 : index
      %c0_13 = arith.constant 0 : index
      %13 = vector.load %arg5[%c0_12, %c0_13] : memref<1x128xf32, #tpu.memory_space<vmem>>, vector<1x128xf32>
      %14 = vector.broadcast %13 : vector<1x128xf32> to vector<16x128xf32>
      %15 = arith.addf %12, %14 : vector<16x128xf32>
      %c0_14 = arith.constant 0 : index
      %c0_15 = arith.constant 0 : index
      %16 = vector.load %arg7[%c0_14, %c0_15] : memref<16x128xf32, #tpu.memory_space<vmem>>, vector<16x128xf32>
      tpu.vector_store %arg7[%c0_14, %c0_15], %15 {strides = array<i32>} : memref<16x128xf32, #tpu.memory_space<vmem>>, vector<16x128xf32>,
    } else {
    }
    return
  }
  func.func @transform_0(%arg0: i32, %arg1: i32, %arg2: i32) -> (i32, i32) {
    %c0_i32 = arith.constant 0 : i32
    return %arg0, %arg2 : i32, i32
  }
  func.func @transform_1(%arg0: i32, %arg1: i32, %arg2: i32) -> (i32, i32) {
    %c0_i32 = arith.constant 0 : i32
    return %arg2, %arg1 : i32, i32
  }
  func.func @transform_2(%arg0: i32, %arg1: i32, %arg2: i32) -> (i32, i32) {
    %c0_i32 = arith.constant 0 : i32
    %c0_i32_0 = arith.constant 0 : i32
    return %c0_i32, %arg1 : i32, i32
  }
  func.func @transform_3(%arg0: i32, %arg1: i32, %arg2: i32) -> (i32, i32) {
    %c0_i32 = arith.constant 0 : i32
    return %arg0, %arg1 : i32, i32
  }
  func.func @transform_4(%arg0: i32, %arg1: i32, %arg2: i32) -> (i32, i32) {
    %c0_i32 = arith.constant 0 : i32
    return %arg0, %arg1 : i32, i32
  }
}

module attributes {stable_mosaic.version = 11 : i64} {
  func.func @_ln_mm_kernel(%arg0: i32, %arg1: i32, %arg2: memref<16x128xf32, #tpu.memory_space<vmem>>, %arg3: memref<1x128xf32, #tpu.memory_space<vmem>>, %arg4: memref<1x128xf32, #tpu.memory_space<vmem>>, %arg5: memref<128x512xbf16, #tpu.memory_space<vmem>>, %arg6: memref<1x512xf32, #tpu.memory_space<vmem>>, %arg7: memref<16x512xbf16, #tpu.memory_space<vmem>>, %arg8: memref<16x128xbf16, #tpu.memory_space<vmem>>) attributes {dimension_semantics = [#tpu.dimension_semantics<parallel>, #tpu.dimension_semantics<arbitrary>], iteration_bounds = array<i64: 1, 1>, scalar_prefetch = 0 : i64, scratch_operands = 1 : i64, tpu.core_type = #tpu.core_type<tc>, window_params = [{transform_indices = @transform_0, window_bounds = array<i64: 16, 128>}, {pipeline_mode = #tpu.pipeline_mode<synchronous>, transform_indices = @transform_1, window_bounds = array<i64: 1, 128>}, {pipeline_mode = #tpu.pipeline_mode<synchronous>, transform_indices = @transform_2, window_bounds = array<i64: 1, 128>}, {transform_indices = @transform_3, window_bounds = array<i64: 128, 512>}, {transform_indices = @transform_4, window_bounds = array<i64: 1, 512>}, {transform_indices = @transform_5, window_bounds = array<i64: 16, 512>}]} {
    %c0_i32 = arith.constant 0 : i32
    %0 = arith.cmpi eq, %arg1, %c0_i32 : i32
    %1 = arith.extui %0 : i1 to i32
    %c0_i32_0 = arith.constant 0 : i32
    %2 = arith.cmpi ne, %1, %c0_i32_0 : i32
    scf.if %2 {
      %c0_10 = arith.constant 0 : index
      %c0_11 = arith.constant 0 : index
      %19 = vector.load %arg2[%c0_10, %c0_11] : memref<16x128xf32, #tpu.memory_space<vmem>>, vector<16x128xf32>
      %cst_12 = arith.constant dense<0.000000e+00> : vector<16xf32>
      %20 = vector.multi_reduction <add>, %19, %cst_12 [1] : vector<16x128xf32> to vector<16xf32>
      %21 = vector.shape_cast %20 : vector<16xf32> to vector<16x1xf32>
      %cst_13 = arith.constant 1.280000e+02 : f32
      %22 = vector.broadcast %cst_13 : f32 to vector<16x1xf32>
      %23 = arith.divf %21, %22 : vector<16x1xf32>
      %24 = vector.broadcast %23 : vector<16x1xf32> to vector<16x128xf32>
      %25 = arith.subf %19, %24 : vector<16x128xf32>
      %26 = arith.mulf %25, %25 : vector<16x128xf32>
      %cst_14 = arith.constant dense<0.000000e+00> : vector<16xf32>
      %27 = vector.multi_reduction <add>, %26, %cst_14 [1] : vector<16x128xf32> to vector<16xf32>
      %28 = vector.shape_cast %27 : vector<16xf32> to vector<16x1xf32>
      %cst_15 = arith.constant 1.280000e+02 : f32
      %29 = vector.broadcast %cst_15 : f32 to vector<16x1xf32>
      %30 = arith.divf %28, %29 : vector<16x1xf32>
      %31 = vector.broadcast %23 : vector<16x1xf32> to vector<16x128xf32>
      %32 = arith.subf %19, %31 : vector<16x128xf32>
      %cst_16 = arith.constant 9.99999974E-6 : f32
      %33 = vector.broadcast %cst_16 : f32 to vector<16x1xf32>
      %34 = arith.addf %30, %33 : vector<16x1xf32>
      %35 = math.rsqrt %34 : vector<16x1xf32>
      %36 = vector.broadcast %35 : vector<16x1xf32> to vector<16x128xf32>
      %37 = arith.mulf %32, %36 : vector<16x128xf32>
      %c0_17 = arith.constant 0 : index
      %c0_18 = arith.constant 0 : index
      %38 = vector.load %arg3[%c0_17, %c0_18] : memref<1x128xf32, #tpu.memory_space<vmem>>, vector<1x128xf32>
      %39 = vector.broadcast %38 : vector<1x128xf32> to vector<16x128xf32>
      %40 = arith.mulf %37, %39 : vector<16x128xf32>
      %c0_19 = arith.constant 0 : index
      %c0_20 = arith.constant 0 : index
      %41 = vector.load %arg4[%c0_19, %c0_20] : memref<1x128xf32, #tpu.memory_space<vmem>>, vector<1x128xf32>
      %42 = vector.broadcast %41 : vector<1x128xf32> to vector<16x128xf32>
      %43 = arith.addf %40, %42 : vector<16x128xf32>
      %44 = arith.truncf %43 : vector<16x128xf32> to vector<16x128xbf16>
      %c0_21 = arith.constant 0 : index
      %c0_22 = arith.constant 0 : index
      %45 = vector.load %arg8[%c0_21, %c0_22] : memref<16x128xbf16, #tpu.memory_space<vmem>>, vector<16x128xbf16>
      tpu.vector_store %arg8[%c0_21, %c0_22], %44 {strides = array<i32>} : memref<16x128xbf16, #tpu.memory_space<vmem>>, vector<16x128xbf16>,
    } else {
    }
    %c0 = arith.constant 0 : index
    %c0_1 = arith.constant 0 : index
    %3 = vector.load %arg8[%c0, %c0_1] : memref<16x128xbf16, #tpu.memory_space<vmem>>, vector<16x128xbf16>
    %c0_2 = arith.constant 0 : index
    %c0_3 = arith.constant 0 : index
    %4 = vector.load %arg5[%c0_2, %c0_3] : memref<128x512xbf16, #tpu.memory_space<vmem>>, vector<128x512xbf16>
    %cst = arith.constant dense<0.000000e+00> : vector<16x512xf32>
    %5 = tpu.matmul %3, %4, %cst {dimension_numbers = #tpu.dot_dimension_numbers<[1], [0], [0], [1], [0, 0, 1, 1], [], []>} : vector<16x128xbf16>, vector<128x512xbf16>, vector<16x512xf32> -> vector<16x512xf32>
    %c0_4 = arith.constant 0 : index
    %c0_5 = arith.constant 0 : index
    %6 = vector.load %arg6[%c0_4, %c0_5] : memref<1x512xf32, #tpu.memory_space<vmem>>, vector<1x512xf32>
    %7 = vector.broadcast %6 : vector<1x512xf32> to vector<16x512xf32>
    %8 = arith.addf %5, %7 : vector<16x512xf32>
    %cst_6 = arith.constant 1.702000e+00 : f32
    %9 = vector.broadcast %cst_6 : f32 to vector<16x512xf32>
    %10 = arith.mulf %9, %8 : vector<16x512xf32>
    %11 = arith.negf %10 : vector<16x512xf32>
    %12 = math.exp %11 : vector<16x512xf32>
    %cst_7 = arith.constant 1.000000e+00 : f32
    %13 = vector.broadcast %cst_7 : f32 to vector<16x512xf32>
    %14 = arith.addf %13, %12 : vector<16x512xf32>
    %15 = arith.divf %13, %14 : vector<16x512xf32>
    %16 = arith.mulf %8, %15 : vector<16x512xf32>
    %17 = arith.truncf %16 : vector<16x512xf32> to vector<16x512xbf16>
    %c0_8 = arith.constant 0 : index
    %c0_9 = arith.constant 0 : index
    %18 = vector.load %arg7[%c0_8, %c0_9] : memref<16x512xbf16, #tpu.memory_space<vmem>>, vector<16x512xbf16>
    tpu.vector_store %arg7[%c0_8, %c0_9], %17 {strides = array<i32>} : memref<16x512xbf16, #tpu.memory_space<vmem>>, vector<16x512xbf16>,
    return
  }
  func.func @transform_0(%arg0: i32, %arg1: i32) -> (i32, i32) {
    %c0_i32 = arith.constant 0 : i32
    %c0_i32_0 = arith.constant 0 : i32
    return %arg0, %c0_i32 : i32, i32
  }
  func.func @transform_1(%arg0: i32, %arg1: i32) -> (i32, i32) {
    %c0_i32 = arith.constant 0 : i32
    %c0_i32_0 = arith.constant 0 : i32
    %c0_i32_1 = arith.constant 0 : i32
    return %c0_i32, %c0_i32_0 : i32, i32
  }
  func.func @transform_2(%arg0: i32, %arg1: i32) -> (i32, i32) {
    %c0_i32 = arith.constant 0 : i32
    %c0_i32_0 = arith.constant 0 : i32
    %c0_i32_1 = arith.constant 0 : i32
    return %c0_i32, %c0_i32_0 : i32, i32
  }
  func.func @transform_3(%arg0: i32, %arg1: i32) -> (i32, i32) {
    %c0_i32 = arith.constant 0 : i32
    %c0_i32_0 = arith.constant 0 : i32
    return %c0_i32, %arg1 : i32, i32
  }
  func.func @transform_4(%arg0: i32, %arg1: i32) -> (i32, i32) {
    %c0_i32 = arith.constant 0 : i32
    %c0_i32_0 = arith.constant 0 : i32
    return %c0_i32, %arg1 : i32, i32
  }
  func.func @transform_5(%arg0: i32, %arg1: i32) -> (i32, i32) {
    %c0_i32 = arith.constant 0 : i32
    return %arg0, %arg1 : i32, i32
  }
}

module attributes {stable_mosaic.version = 11 : i64} {
  func.func @_mm_kernel(%arg0: i32, %arg1: i32, %arg2: i32, %arg3: memref<16x512xbf16, #tpu.memory_space<vmem>>, %arg4: memref<512x128xbf16, #tpu.memory_space<vmem>>, %arg5: memref<1x128xf32, #tpu.memory_space<vmem>>, %arg6: memref<16x128xf32, #tpu.memory_space<vmem>>, %arg7: memref<16x128xf32, #tpu.memory_space<vmem>>, %arg8: memref<16x128xf32, #tpu.memory_space<vmem>>) attributes {dimension_semantics = [#tpu.dimension_semantics<parallel>, #tpu.dimension_semantics<parallel>, #tpu.dimension_semantics<arbitrary>], iteration_bounds = array<i64: 1, 1, 1>, scalar_prefetch = 0 : i64, scratch_operands = 1 : i64, tpu.core_type = #tpu.core_type<tc>, window_params = [{transform_indices = @transform_0, window_bounds = array<i64: 16, 512>}, {transform_indices = @transform_1, window_bounds = array<i64: 512, 128>}, {transform_indices = @transform_2, window_bounds = array<i64: 1, 128>}, {transform_indices = @transform_3, window_bounds = array<i64: 16, 128>}, {transform_indices = @transform_4, window_bounds = array<i64: 16, 128>}]} {
    %c0_i32 = arith.constant 0 : i32
    %0 = arith.cmpi eq, %arg2, %c0_i32 : i32
    %1 = arith.extui %0 : i1 to i32
    %c0_i32_0 = arith.constant 0 : i32
    %2 = arith.cmpi ne, %1, %c0_i32_0 : i32
    scf.if %2 {
      %c0_10 = arith.constant 0 : index
      %c0_11 = arith.constant 0 : index
      %12 = vector.load %arg6[%c0_10, %c0_11] : memref<16x128xf32, #tpu.memory_space<vmem>>, vector<16x128xf32>
      %c0_12 = arith.constant 0 : index
      %c0_13 = arith.constant 0 : index
      %13 = vector.load %arg8[%c0_12, %c0_13] : memref<16x128xf32, #tpu.memory_space<vmem>>, vector<16x128xf32>
      tpu.vector_store %arg8[%c0_12, %c0_13], %12 {strides = array<i32>} : memref<16x128xf32, #tpu.memory_space<vmem>>, vector<16x128xf32>,
    } else {
    }
    %c0 = arith.constant 0 : index
    %c0_1 = arith.constant 0 : index
    %3 = vector.load %arg8[%c0, %c0_1] : memref<16x128xf32, #tpu.memory_space<vmem>>, vector<16x128xf32>
    %c0_2 = arith.constant 0 : index
    %c0_3 = arith.constant 0 : index
    %4 = vector.load %arg3[%c0_2, %c0_3] : memref<16x512xbf16, #tpu.memory_space<vmem>>, vector<16x512xbf16>
    %c0_4 = arith.constant 0 : index
    %c0_5 = arith.constant 0 : index
    %5 = vector.load %arg4[%c0_4, %c0_5] : memref<512x128xbf16, #tpu.memory_space<vmem>>, vector<512x128xbf16>
    %cst = arith.constant dense<0.000000e+00> : vector<16x128xf32>
    %6 = tpu.matmul %4, %5, %cst {dimension_numbers = #tpu.dot_dimension_numbers<[1], [0], [0], [1], [0, 0, 1, 1], [], []>} : vector<16x512xbf16>, vector<512x128xbf16>, vector<16x128xf32> -> vector<16x128xf32>
    %7 = arith.addf %3, %6 : vector<16x128xf32>
    %c0_6 = arith.constant 0 : index
    %c0_7 = arith.constant 0 : index
    %8 = vector.load %arg8[%c0_6, %c0_7] : memref<16x128xf32, #tpu.memory_space<vmem>>, vector<16x128xf32>
    tpu.vector_store %arg8[%c0_6, %c0_7], %7 {strides = array<i32>} : memref<16x128xf32, #tpu.memory_space<vmem>>, vector<16x128xf32>,
    %c0_i32_8 = arith.constant 0 : i32
    %9 = arith.cmpi eq, %arg2, %c0_i32_8 : i32
    %10 = arith.extui %9 : i1 to i32
    %c0_i32_9 = arith.constant 0 : i32
    %11 = arith.cmpi ne, %10, %c0_i32_9 : i32
    scf.if %11 {
      %c0_10 = arith.constant 0 : index
      %c0_11 = arith.constant 0 : index
      %12 = vector.load %arg8[%c0_10, %c0_11] : memref<16x128xf32, #tpu.memory_space<vmem>>, vector<16x128xf32>
      %c0_12 = arith.constant 0 : index
      %c0_13 = arith.constant 0 : index
      %13 = vector.load %arg5[%c0_12, %c0_13] : memref<1x128xf32, #tpu.memory_space<vmem>>, vector<1x128xf32>
      %14 = vector.broadcast %13 : vector<1x128xf32> to vector<16x128xf32>
      %15 = arith.addf %12, %14 : vector<16x128xf32>
      %c0_14 = arith.constant 0 : index
      %c0_15 = arith.constant 0 : index
      %16 = vector.load %arg7[%c0_14, %c0_15] : memref<16x128xf32, #tpu.memory_space<vmem>>, vector<16x128xf32>
      tpu.vector_store %arg7[%c0_14, %c0_15], %15 {strides = array<i32>} : memref<16x128xf32, #tpu.memory_space<vmem>>, vector<16x128xf32>,
    } else {
    }
    return
  }
  func.func @transform_0(%arg0: i32, %arg1: i32, %arg2: i32) -> (i32, i32) {
    %c0_i32 = arith.constant 0 : i32
    return %arg0, %arg2 : i32, i32
  }
  func.func @transform_1(%arg0: i32, %arg1: i32, %arg2: i32) -> (i32, i32) {
    %c0_i32 = arith.constant 0 : i32
    return %arg2, %arg1 : i32, i32
  }
  func.func @transform_2(%arg0: i32, %arg1: i32, %arg2: i32) -> (i32, i32) {
    %c0_i32 = arith.constant 0 : i32
    %c0_i32_0 = arith.constant 0 : i32
    return %c0_i32, %arg1 : i32, i32
  }
  func.func @transform_3(%arg0: i32, %arg1: i32, %arg2: i32) -> (i32, i32) {
    %c0_i32 = arith.constant 0 : i32
    return %arg0, %arg1 : i32, i32
  }
  func.func @transform_4(%arg0: i32, %arg1: i32, %arg2: i32) -> (i32, i32) {
    %c0_i32 = arith.constant 0 : i32
    return %arg0, %arg1 : i32, i32
  }
}

</mosaic_0001>

<llo_original>
// kernel: clip_forward.14
$region0: #{clip_forward.14}
  #allocation0 [shape = 'u32[]', space=smem, size = 0x4, offset = 0x4, fixed_abs, tag = 'smem constant byte address 0x4 - core index']
  #allocation1 [shape = 'u32[144,128]{1,0:T(1,128)}', space=vmem, size = 0x12000, scoped, tag = 'internal scratch']
  %s0 = inlined_call_operand.vmem [shape: f32[16,128], index: 0, kind: input, shape index: {}]
  %s1 = inlined_call_operand.vmem [shape: f32[1,128], index: 1, kind: input, shape index: {}]
  %s2 = inlined_call_operand.vmem [shape: f32[1,128], index: 2, kind: input, shape index: {}]
  %s3 = inlined_call_operand.vmem [shape: f32[16,128], index: 3, kind: output, shape index: {}]
  %s4 = sld [smem:[#allocation0]]
  $region22: #{clip_forward.14} parent=0
    _
  %s6 = ssub.s32 1, %s4
  %s7 = scalar_select 0, %s6, %s4
  // Predicated region
  $region2: #{clip_forward.14} parent=0 // pred_check
    _
  $region3: #{clip_forward.14} parent=0 // pred_check_branch
    %9 = sbr.rel (0) target = $region5
  $region4: #{clip_forward.14} parent=0 // pred_region
    _
  $region5: #{clip_forward.14} parent=0 // pred_fallthru
    _
  // Predicated region
  $region6: #{clip_forward.14} parent=0 // pred_check
    _
  $region7: #{clip_forward.14} parent=0 // pred_check_branch
    %11 = sbr.rel (0) target = $region9
  $region8: #{clip_forward.14} parent=0 // pred_region
    _
  $region9: #{clip_forward.14} parent=0 // pred_fallthru
    _
  // Predicated region
  $region10: #{clip_forward.14} parent=0 // pred_check
    _
  $region11: #{clip_forward.14} parent=0 // pred_check_branch
    %13 = sbr.rel (0) target = $region13
  $region12: #{clip_forward.14} parent=0 // pred_region
    _
  $region13: #{clip_forward.14} parent=0 // pred_fallthru
    _
  %v14 = vld [vmem:[%s0] sm:$0xff]
  %v15 = vld [vmem:[%s0 + $0x8] sm:$0xff]
  %16 = vadd.xlane.f32.xlu0 %v14
  %v17 = vpop.xlane.xlu0 %16
  %18 = vadd.xlane.f32.xlu0 %v15
  %v19 = vpop.xlane.xlu0 %18
  %v20 = vrcp.pop 128.0
  %v21 = vmul.f32 %v17, %v20
  %v22 = vmul.f32 %v19, %v20
  %v23 = vsub.f32 %v14, %v21
  %v24 = vsub.f32 %v15, %v22
  %v25 = vmul.f32 %v23, %v23
  %v26 = vmul.f32 %v24, %v24
  %27 = vadd.xlane.f32.xlu0 %v25
  %v28 = vpop.xlane.xlu0 %27
  %29 = vadd.xlane.f32.xlu0 %v26
  %v30 = vpop.xlane.xlu0 %29
  %v31 = vmul.f32 %v28, %v20
  %v32 = vmul.f32 %v30, %v20
  %v33 = vadd.f32 %v31, 1e-05
  %v34 = vadd.f32 %v32, 1e-05
  %v35 = vrsqrt.pop %v33
  %v36 = vrsqrt.pop %v34
  %v37 = vmul.f32 %v23, %v35
  %v38 = vmul.f32 %v24, %v36
  %v39 = vld [vmem:[%s1] sm:$0x1]
  %v41 = vlaneseq
  %v42 = vshrl.u32 %v41, 7
  %v43 = vsub.s32 0, %v42
  %v44 = vrot.slane %v39, %v43
  %v46 = vmul.f32 %v37, %v44
  %v47 = vmul.f32 %v38, %v44
  %v48 = vld [vmem:[%s2] sm:$0x1]
  %v50 = vlaneseq
  %v51 = vshrl.u32 %v50, 7
  %v52 = vsub.s32 0, %v51
  %v53 = vrot.slane %v48, %v52
  %v55 = vadd.f32 %v46, %v53
  %v56 = vadd.f32 %v47, %v53
  %57 = vst [vmem:[%s3] sm:$0xff] %v55
  %58 = vst [vmem:[%s3 + $0x8] sm:$0xff] %v56
  // Predicated region
  $region14: #{clip_forward.14} parent=0 // pred_check
    _
  $region15: #{clip_forward.14} parent=0 // pred_check_branch
    %60 = sbr.rel (0) target = $region17
  $region16: #{clip_forward.14} parent=0 // pred_region
    _
  $region17: #{clip_forward.14} parent=0 // pred_fallthru
    _
  // Predicated region
  $region18: #{clip_forward.14} parent=0 // pred_check
    _
  $region19: #{clip_forward.14} parent=0 // pred_check_branch
    %62 = sbr.rel (0) target = $region21
  $region20: #{clip_forward.14} parent=0 // pred_region
    _
  $region21: #{clip_forward.14} parent=0 // pred_fallthru
    _

// kernel: clip_forward.13
$region0: #{clip_forward.13}
  #allocation0 [shape = 'u32[]', space=smem, size = 0x4, offset = 0x4, fixed_abs, tag = 'smem constant byte address 0x4 - core index']
  #allocation1 [shape = 'u32[144,128]{1,0:T(1,128)}', space=vmem, size = 0x12000, scoped, tag = 'internal scratch']
  #allocation2 [shape = 'f32[8,128]{1,0:T(8,128)}', space=vmem, size = 0x1000, scoped, tag = 'scratch operand']
  %s0 = inlined_call_operand.vmem [shape: f32[8,256], index: 0, kind: input, shape index: {}]
  %s1 = inlined_call_operand.vmem [shape: bf16[256,128], index: 1, kind: input, shape index: {}]
  %s2 = inlined_call_operand.vmem [shape: f32[8,128], index: 2, kind: output, shape index: {}]
  %s3 = sld [smem:[#allocation0]]
  $region26: #{clip_forward.13} parent=0
    _
  %s5 = ssub.s32 1, %s3
  %s6 = scalar_select 0, %s5, %s3
  // Predicated region
  $region2: #{clip_forward.13} parent=0 // pred_check
    _
  $region3: #{clip_forward.13} parent=0 // pred_check_branch
    %8 = sbr.rel (0) target = $region5
  $region4: #{clip_forward.13} parent=0 // pred_region
    _
  $region5: #{clip_forward.13} parent=0 // pred_fallthru
    _
  // Predicated region
  $region6: #{clip_forward.13} parent=0 // pred_check
    _
  $region7: #{clip_forward.13} parent=0 // pred_check_branch
    %10 = sbr.rel (0) target = $region9
  $region8: #{clip_forward.13} parent=0 // pred_region
    _
  $region9: #{clip_forward.13} parent=0 // pred_fallthru
    _
  %p12 = scmp.eq.s32.totalorder 0, 0
  // Predicated region
  $region10: #{clip_forward.13} parent=0 // pred_check
    %p13 = pneg %p12
  $region11: #{clip_forward.13} parent=0 // pred_check_branch
    %15 = sbr.rel (%p13) target = $region13
  $region12: #{clip_forward.13} parent=0 // pred_region
    %16 = vst [vmem:[#allocation2] sm:$0xff] 0.0
  $region13: #{clip_forward.13} parent=0 // pred_fallthru
    _
  %v17 = vld [vmem:[#allocation2] sm:$0xff]
  %v18 = vld [vmem:[%s0] sm:$0xff]
  %v19 = vld [vmem:[%s0 + $0x8] sm:$0xff]
  %v20 = vpack.c.bf16 %v18, %v18
  %v21 = vpack.c.bf16 %v19, %v19
  %v22 = vld [vmem:[%s1] sm:$0xf]
  %v23 = vld [vmem:[%s1 + $0x4] sm:$0xf]
  %v24 = vld [vmem:[%s1 + $0x8] sm:$0xf]
  %v25 = vld [vmem:[%s1 + $0xc] sm:$0xf]
  %v26 = vld [vmem:[%s1 + $0x10] sm:$0xf]
  %v27 = vld [vmem:[%s1 + $0x14] sm:$0xf]
  %v28 = vld [vmem:[%s1 + $0x18] sm:$0xf]
  %v29 = vld [vmem:[%s1 + $0x1c] sm:$0xf]
  %v30 = vld [vmem:[%s1 + $0x20] sm:$0xf]
  %v31 = vld [vmem:[%s1 + $0x24] sm:$0xf]
  %v32 = vld [vmem:[%s1 + $0x28] sm:$0xf]
  %v33 = vld [vmem:[%s1 + $0x2c] sm:$0xf]
  %v34 = vld [vmem:[%s1 + $0x30] sm:$0xf]
  %v35 = vld [vmem:[%s1 + $0x34] sm:$0xf]
  %v36 = vld [vmem:[%s1 + $0x38] sm:$0xf]
  %v37 = vld [vmem:[%s1 + $0x3c] sm:$0xf]
  %v38 = vld [vmem:[%s1 + $0x40] sm:$0xf]
  %v39 = vld [vmem:[%s1 + $0x44] sm:$0xf]
  %v40 = vld [vmem:[%s1 + $0x48] sm:$0xf]
  %v41 = vld [vmem:[%s1 + $0x4c] sm:$0xf]
  %v42 = vld [vmem:[%s1 + $0x50] sm:$0xf]
  %v43 = vld [vmem:[%s1 + $0x54] sm:$0xf]
  %v44 = vld [vmem:[%s1 + $0x58] sm:$0xf]
  %v45 = vld [vmem:[%s1 + $0x5c] sm:$0xf]
  %v46 = vld [vmem:[%s1 + $0x60] sm:$0xf]
  %v47 = vld [vmem:[%s1 + $0x64] sm:$0xf]
  %v48 = vld [vmem:[%s1 + $0x68] sm:$0xf]
  %v49 = vld [vmem:[%s1 + $0x6c] sm:$0xf]
  %v50 = vld [vmem:[%s1 + $0x70] sm:$0xf]
  %v51 = vld [vmem:[%s1 + $0x74] sm:$0xf]
  %v52 = vld [vmem:[%s1 + $0x78] sm:$0xf]
  %v53 = vld [vmem:[%s1 + $0x7c] sm:$0xf]
  %v86 = vunpack.c.l.b16 %v22
  %v87 = vunpack.c.l.b16 %v23
  %v88 = vunpack.c.l.b16 %v24
  %v89 = vunpack.c.l.b16 %v25
  %v90 = vunpack.c.l.b16 %v26
  %v91 = vunpack.c.l.b16 %v27
  %v92 = vunpack.c.l.b16 %v28
  %v93 = vunpack.c.l.b16 %v29
  %v94 = vunpack.c.l.b16 %v30
  %v95 = vunpack.c.l.b16 %v31
  %v96 = vunpack.c.l.b16 %v32
  %v97 = vunpack.c.l.b16 %v33
  %v98 = vunpack.c.l.b16 %v34
  %v99 = vunpack.c.l.b16 %v35
  %v100 = vunpack.c.l.b16 %v36
  %v101 = vunpack.c.l.b16 %v37
  %v102 = vunpack.c.l.b16 %v38
  %v103 = vunpack.c.l.b16 %v39
  %v104 = vunpack.c.l.b16 %v40
  %v105 = vunpack.c.l.b16 %v41
  %v106 = vunpack.c.l.b16 %v42
  %v107 = vunpack.c.l.b16 %v43
  %v108 = vunpack.c.l.b16 %v44
  %v109 = vunpack.c.l.b16 %v45
  %v110 = vunpack.c.l.b16 %v46
  %v111 = vunpack.c.l.b16 %v47
  %v112 = vunpack.c.l.b16 %v48
  %v113 = vunpack.c.l.b16 %v49
  %v114 = vunpack.c.l.b16 %v50
  %v115 = vunpack.c.l.b16 %v51
  %v116 = vunpack.c.l.b16 %v52
  %v117 = vunpack.c.l.b16 %v53
  %v118 = vpack.c.b16 %v87, %v86
  %v119 = vpack.c.b16 %v89, %v88
  %v120 = vpack.c.b16 %v91, %v90
  %v121 = vpack.c.b16 %v93, %v92
  %v122 = vpack.c.b16 %v95, %v94
  %v123 = vpack.c.b16 %v97, %v96
  %v124 = vpack.c.b16 %v99, %v98
  %v125 = vpack.c.b16 %v101, %v100
  %v126 = vpack.c.b16 %v103, %v102
  %v127 = vpack.c.b16 %v105, %v104
  %v128 = vpack.c.b16 %v107, %v106
  %v129 = vpack.c.b16 %v109, %v108
  %v130 = vpack.c.b16 %v111, %v110
  %v131 = vpack.c.b16 %v113, %v112
  %v132 = vpack.c.b16 %v115, %v114
  %v133 = vpack.c.b16 %v117, %v116
  %150 = vmatprep.subr.bf16.mxu0 0
  %151 = vmatpush1.bf16.msra.mxu0 %v125
  %152 = vmatprep.subr.bf16.mxu0 0
  %153 = vmatpush1.bf16.msra.mxu0 %v124
  %154 = vmatprep.subr.bf16.mxu0 0
  %155 = vmatpush1.bf16.msra.mxu0 %v123
  %156 = vmatprep.subr.bf16.mxu0 0
  %157 = vmatpush1.bf16.msra.mxu0 %v122
  %158 = vmatprep.subr.bf16.mxu0 0
  %159 = vmatpush1.bf16.msra.mxu0 %v121
  %160 = vmatprep.subr.bf16.mxu0 0
  %161 = vmatpush1.bf16.msra.mxu0 %v120
  %162 = vmatprep.subr.bf16.mxu0 0
  %163 = vmatpush1.bf16.msra.mxu0 %v119
  %164 = vmatprep.subr.bf16.mxu0 0
  %165 = vmatpush1.bf16.msra.mxu0 %v118
  %166 = vmatprep.subr.bf16.mxu0 0
  %167 = vmatpush2.bf16.msra.mxu0 %v133
  %168 = vmatprep.subr.bf16.mxu0 0
  %169 = vmatpush2.bf16.msra.mxu0 %v132
  %170 = vmatprep.subr.bf16.mxu0 0
  %171 = vmatpush2.bf16.msra.mxu0 %v131
  %172 = vmatprep.subr.bf16.mxu0 0
  %173 = vmatpush2.bf16.msra.mxu0 %v130
  %174 = vmatprep.subr.bf16.mxu0 0
  %175 = vmatpush2.bf16.msra.mxu0 %v129
  %176 = vmatprep.subr.bf16.mxu0 0
  %177 = vmatpush2.bf16.msra.mxu0 %v128
  %178 = vmatprep.subr.bf16.mxu0 0
  %179 = vmatpush2.bf16.msra.mxu0 %v127
  %180 = vmatprep.subr.bf16.mxu0 0
  %181 = vmatpush2.bf16.msra.mxu0 %v126
  %182 = vmatprep.mubr.bf16.mxu0 %v21
  %183 = vmatmul.mubr.bf16.gmra.mxu0 %v20
  %v184 = vpop.f32.mrf.mxu0
  %v185 = vadd.f32 0.0, %v184
  %v186 = vpop.f32.mrf.mxu0
  %v187 = vpop.f32.mrf.mxu0
  %v188 = vpop.f32.mrf.mxu0
  %189 = vdwg.mxu0
  %v190 = vadd.f32 %v17, %v185
  %191 = vst [vmem:[#allocation2] sm:$0xff] %v190
  // Predicated region
  $region14: #{clip_forward.13} parent=0 // pred_check
    %p192 = pneg %p12
  $region15: #{clip_forward.13} parent=0 // pred_check_branch
    %194 = sbr.rel (%p192) target = $region17
  $region16: #{clip_forward.13} parent=0 // pred_region
    %v195 = vld [vmem:[#allocation2] sm:$0xff]
    %196 = vst [vmem:[%s2] sm:$0xff] %v195
  $region17: #{clip_forward.13} parent=0 // pred_fallthru
    _
  // Predicated region
  $region18: #{clip_forward.13} parent=0 // pred_check
    _
  $region19: #{clip_forward.13} parent=0 // pred_check_branch
    %198 = sbr.rel (0) target = $region21
  $region20: #{clip_forward.13} parent=0 // pred_region
    _
  $region21: #{clip_forward.13} parent=0 // pred_fallthru
    _
  // Predicated region
  $region22: #{clip_forward.13} parent=0 // pred_check
    _
  $region23: #{clip_forward.13} parent=0 // pred_check_branch
    %200 = sbr.rel (0) target = $region25
  $region24: #{clip_forward.13} parent=0 // pred_region
    _
  $region25: #{clip_forward.13} parent=0 // pred_fallthru
    _

// kernel: clip_forward.16
$region0: #{clip_forward.16}
  #allocation0 [shape = 'u32[]', space=smem, size = 0x4, offset = 0x4, fixed_abs, tag = 'smem constant byte address 0x4 - core index']
  #allocation1 [shape = 'u32[144,128]{1,0:T(1,128)}', space=vmem, size = 0x12000, scoped, tag = 'internal scratch']
  #allocation2 [shape = 'f32[8,128]{1,0:T(8,128)}', space=vmem, size = 0x1000, scoped, tag = 'scratch operand']
  %s0 = inlined_call_operand.vmem [shape: bf16[2,8,384], index: 0, kind: input, shape index: {}]
  %s1 = inlined_call_operand.vmem [shape: bf16[2,8,128], index: 1, kind: output, shape index: {}]
  %s2 = sld [smem:[#allocation0]]
  $region37: #{clip_forward.16} parent=0
    _
  %s4 = ssub.s32 1, %s2
  %s5 = scalar_select 0, %s4, %s2
  loop: start=0, step=1, limit=4
  $region2: #{clip_forward.16} parent=0 // loop_pre_header
    _
  $region3: #{clip_forward.16} parent=0 // loop_header
    %s7 = sphi 0, %s11
    %p8 = scmp.ge.s32.totalorder %s7, 4
    %s17 = sphi 0, %s19
    %s20 = sphi 0, %s17
    %s21 = sphi 0, %s20
    %s37 = sphi 0, %s21
    %s43 = sphi 0, %s45
    %s46 = sphi 0, %s43
    %s47 = sphi 0, %s46
    %s63 = sphi 0, %s47
  $region4: #{clip_forward.16} parent=0 // loop_header_branch
    %10 = sbr.rel (%p8) target = $region8
  $region5: #{clip_forward.16} parent=0 // loop_body
    %s12 = ssub.s32 %s7, 1
    %s13 = ssub.s32 %s7, 2
    %s14 = sadd.s32 %s7, 1
    %s15 = ssub.s32 %s7, %s14
    %p16 = scmp.eq.s32.totalorder %s15, 0
    %s18 = sadd.s32 %s17, 1
    %s19 = scalar_select %p16, %s17, %s18
    %p22 = pneg %p16
    %p23 = scmp.eq.s32.totalorder %s7, 1
    %p24 = por %p22, %p23
    %p25 = scmp.ne.s32.totalorder %s17, %s20
    %p26 = scmp.eq.s32.totalorder %s7, 0
    %p27 = por %p25, %p26
    %p28 = scmp.ne.s32.totalorder %s17, %s20
    %p29 = scmp.eq.s32.totalorder %s12, 1
    %p30 = por %p28, %p29
    %p31 = scmp.ne.s32.totalorder %s20, %s21
    %p32 = scmp.eq.s32.totalorder %s12, 0
    %p33 = por %p31, %p32
    %p34 = scmp.ne.s32.totalorder %s20, %s21
    %p35 = scmp.eq.s32.totalorder %s13, 1
    %p36 = por %p34, %p35
    %p38 = scmp.ne.s32.totalorder %s21, %s37
    %p39 = scmp.eq.s32.totalorder %s13, 0
    %p40 = por %p38, %p39
    %s41 = ssub.s32 %s7, %s14
    %p42 = scmp.eq.s32.totalorder %s41, 0
    %s44 = sadd.s32 %s43, 1
    %s45 = scalar_select %p42, %s43, %s44
    %p48 = pneg %p42
    %p49 = scmp.eq.s32.totalorder %s7, 1
    %p50 = por %p48, %p49
    %p51 = scmp.ne.s32.totalorder %s43, %s46
    %p52 = scmp.eq.s32.totalorder %s7, 0
    %p53 = por %p51, %p52
    %p54 = scmp.ne.s32.totalorder %s43, %s46
    %p55 = scmp.eq.s32.totalorder %s12, 1
    %p56 = por %p54, %p55
    %p57 = scmp.ne.s32.totalorder %s46, %s47
    %p58 = scmp.eq.s32.totalorder %s12, 0
    %p59 = por %p57, %p58
    %p60 = scmp.ne.s32.totalorder %s46, %s47
    %p61 = scmp.eq.s32.totalorder %s13, 1
    %p62 = por %p60, %p61
    %p64 = scmp.ne.s32.totalorder %s47, %s63
    %p65 = scmp.eq.s32.totalorder %s13, 0
    %p66 = por %p64, %p65
    %p67 = scmp.le.s32.totalorder 1, %s7
    %p68 = scmp.lt.s32.totalorder %s7, 3
    %p69 = pnand %p67, %p68
    %p70 = pneg %p69
    // Predicated region
    $region9: #{clip_forward.16} parent=5 // pred_check
      _
    $region10: #{clip_forward.16} parent=5 // pred_check_branch
      %72 = sbr.rel (%p69) target = $region12
    $region11: #{clip_forward.16} parent=5 // pred_region
      %s73 = ssub.s32 %s7, 1
    $region12: #{clip_forward.16} parent=5 // pred_fallthru
      _
    %p74 = scmp.lt.s32.totalorder %s7, 2
    // Predicated region
    $region13: #{clip_forward.16} parent=5 // pred_check
      %p75 = pneg %p74
    $region14: #{clip_forward.16} parent=5 // pred_check_branch
      %77 = sbr.rel (%p75) target = $region16
    $region15: #{clip_forward.16} parent=5 // pred_region
      // Predicated region
      $region17: #{clip_forward.16} parent=15 // pred_check
        %p78 = pneg %p27
      $region18: #{clip_forward.16} parent=15 // pred_check_branch
        %80 = sbr.rel (%p78) target = $region20
      $region19: #{clip_forward.16} parent=15 // pred_region
        %p81 = scmp.lt.s32.totalorder %s7, 1
        %s82 = scalar_select %p81, %s7, 1
        %s83 = smul.addr %s82, 3
        %s84 = smul.addr %s83, 4
        %s85 = scalar_lea.vmem %s0, %s84
      $region20: #{clip_forward.16} parent=15 // pred_fallthru
        _
    $region16: #{clip_forward.16} parent=5 // pred_fallthru
      _
    %p86 = scmp.le.s32.totalorder 1, %s7
    %p87 = scmp.lt.s32.totalorder %s7, 3
    %p88 = pnand %p86, %p87
    %p89 = pneg %p88
    // Predicated region
    $region21: #{clip_forward.16} parent=5 // pred_check
      _
    $region22: #{clip_forward.16} parent=5 // pred_check_branch
      %91 = sbr.rel (%p88) target = $region24
    $region23: #{clip_forward.16} parent=5 // pred_region
      %s92 = ssub.s32 %s7, 1
      %p93 = scmp.lt.s32.totalorder %s12, 1
      %s94 = scalar_select %p93, %s12, 1
      %s95 = smul.addr %s94, 3
      %s96 = smul.addr %s95, 4
      %s97 = scalar_lea.vmem %s0, %s96
      %p98 = pneg %p33
      %p99 = pneg %p30
      %p100 = pneg %p59
      %p101 = pneg %p56
      %p102 = scmp.lt.s32.totalorder %s12, 1
      %s103 = scalar_select %p102, %s12, 1
      %s104 = smul.addr %s103, 4
      %s105 = scalar_lea.vmem %s1, %s104
      %p106 = scmp.lt.s32.totalorder %s12, 1
      %s107 = scalar_select %p106, %s12, 1
      %s108 = smul.addr %s107, 3
      %s109 = smul.addr %s108, 4
      %s110 = scalar_lea.vmem %s0, %s109
      %p111 = scmp.lt.s32.totalorder %s12, 1
      %s112 = scalar_select %p111, %s12, 1
      %s113 = smul.addr %s112, 4
      %s114 = scalar_lea.vmem %s1, %s113
      %v116 = vlaneseq
      %v117 = vand.u32 %v116, 127
      %vm118 = vcmp.lt.s32.totalorder %v117, 5
      %v119 = vld [vmem:[%s110] sm:$0xf]
      %v120 = vld [vmem:[%s110 + $0x4] sm:$0xf]
      %v121 = vld [vmem:[%s110 + $0x8] sm:$0xf]
      %vm122 = vcmask 523264
      %v124 = vsel %vm122, %v119, 0
      %v127 = vsel %vm122, %v120, 0
      %129 = vmatprep.subr.bf16.mxu0 0
      %130 = vmatpush1.bf16.xpose.msra.mxu0 0
      %131 = vmatprep.subr.bf16.mxu0 0
      %132 = vmatpush1.bf16.xpose.msra.mxu0 0
      %133 = vmatprep.subr.bf16.mxu0 0
      %134 = vmatpush1.bf16.xpose.msra.mxu0 0
      %135 = vmatprep.subr.bf16.mxu0 0
      %136 = vmatpush1.bf16.xpose.msra.mxu0 0
      %137 = vmatprep.subr.bf16.mxu0 0
      %138 = vmatpush1.bf16.xpose.msra.mxu0 0
      %139 = vmatprep.subr.bf16.mxu0 0
      %140 = vmatpush1.bf16.xpose.msra.mxu0 0
      %141 = vmatprep.subr.bf16.mxu0 0
      %142 = vmatpush1.bf16.xpose.msra.mxu0 0
      %143 = vmatprep.subr.bf16.mxu0 0
      %144 = vmatpush1.bf16.xpose.msra.mxu0 %v127
      %145 = vmatprep.subr.bf16.mxu0 0
      %146 = vmatpush2.bf16.xpose.msra.mxu0 0
      %147 = vmatprep.subr.bf16.mxu0 0
      %148 = vmatpush2.bf16.xpose.msra.mxu0 0
      %149 = vmatprep.subr.bf16.mxu0 0
      %150 = vmatpush2.bf16.xpose.msra.mxu0 0
      %151 = vmatprep.subr.bf16.mxu0 0
      %152 = vmatpush2.bf16.xpose.msra.mxu0 0
      %153 = vmatprep.subr.bf16.mxu0 0
      %154 = vmatpush2.bf16.xpose.msra.mxu0 0
      %155 = vmatprep.subr.bf16.mxu0 0
      %156 = vmatpush2.bf16.xpose.msra.mxu0 0
      %157 = vmatprep.subr.bf16.mxu0 0
      %158 = vmatpush2.bf16.xpose.msra.mxu0 0
      %159 = vmatprep.subr.bf16.mxu0 0
      %160 = vmatpush2.bf16.xpose.msra.mxu0 0
      %161 = vmatprep.mubr.bf16.mxu0 0
      %162 = vmatmul.mubr.bf16.gmra.mxu0 %v124
      %v163 = vpop.f32.mrf.mxu0
      %v164 = vadd.f32 0.0, %v163
      %v165 = vpop.f32.mrf.mxu0
      %v166 = vpop.f32.mrf.mxu0
      %v167 = vpop.f32.mrf.mxu0
      %168 = vdwg.mxu0
      %v169 = vsel %vm118, %v164, -1e+30
      %vm170 = vcmask 64512
      %v171 = vsel %vm170, %v169, -inf
      %172 = vmax.xlane.f32.xlu0 %v171
      %v173 = vpop.xlane.xlu0 %172
      %v174 = vsub.f32 %v169, %v173
      %v175 = vmul.f32 %v174, 1.442695
      %v176 = vpow.pop %v175
      %v177 = vsel %vm170, %v176, 0.0
      %178 = vadd.xlane.f32.xlu0 %v177
      %v179 = vpop.xlane.xlu0 %178
      %v180 = vrcp.pop %v179
      %v181 = vmul.f32 %v176, %v180
      %v182 = vpack.c.bf16 %v181, %v181
      %v184 = vsel %vm170, %v182, 0
      %vm186 = vcmask 1043456
      %v188 = vsel %vm186, %v121, 0
      %190 = vmatprep.subr.bf16.mxu0 0
      %191 = vmatpush1.bf16.msra.mxu0 0
      %192 = vmatprep.subr.bf16.mxu0 0
      %193 = vmatpush1.bf16.msra.mxu0 0
      %194 = vmatprep.subr.bf16.mxu0 0
      %195 = vmatpush1.bf16.msra.mxu0 0
      %196 = vmatprep.subr.bf16.mxu0 0
      %197 = vmatpush1.bf16.msra.mxu0 0
      %198 = vmatprep.subr.bf16.mxu0 0
      %199 = vmatpush1.bf16.msra.mxu0 0
      %200 = vmatprep.subr.bf16.mxu0 0
      %201 = vmatpush1.bf16.msra.mxu0 0
      %202 = vmatprep.subr.bf16.mxu0 0
      %203 = vmatpush1.bf16.msra.mxu0 0
      %204 = vmatprep.subr.bf16.mxu0 0
      %205 = vmatpush1.bf16.msra.mxu0 %v188
      %206 = vmatprep.subr.bf16.mxu0 0
      %207 = vmatpush2.bf16.msra.mxu0 0
      %208 = vmatprep.subr.bf16.mxu0 0
      %209 = vmatpush2.bf16.msra.mxu0 0
      %210 = vmatprep.subr.bf16.mxu0 0
      %211 = vmatpush2.bf16.msra.mxu0 0
      %212 = vmatprep.subr.bf16.mxu0 0
      %213 = vmatpush2.bf16.msra.mxu0 0
      %214 = vmatprep.subr.bf16.mxu0 0
      %215 = vmatpush2.bf16.msra.mxu0 0
      %216 = vmatprep.subr.bf16.mxu0 0
      %217 = vmatpush2.bf16.msra.mxu0 0
      %218 = vmatprep.subr.bf16.mxu0 0
      %219 = vmatpush2.bf16.msra.mxu0 0
      %220 = vmatprep.subr.bf16.mxu0 0
      %221 = vmatpush2.bf16.msra.mxu0 0
      %222 = vmatprep.mubr.bf16.mxu0 0
      %223 = vmatmul.mubr.bf16.gmra.mxu0 %v184
      %v224 = vpop.f32.mrf.mxu0
      %v225 = vadd.f32 0.0, %v224
      %v226 = vpop.f32.mrf.mxu0
      %v227 = vpop.f32.mrf.mxu0
      %v228 = vpop.f32.mrf.mxu0
      %229 = vdwg.mxu0
      %230 = vst.msk [vmem:[#allocation2] sm:$0xff] %vm122, %v225
      %v231 = vld [vmem:[%s110] sm:$0xf]
      %v232 = vld [vmem:[%s110 + $0x4] sm:$0xf]
      %v233 = vld [vmem:[%s110 + $0x8] sm:$0xf]
      %v235 = vunpack.c.l.b16 %v231
      %v236 = vpack.c.b16 %v235, %v235
      %237 = vrot.lane.b32.xlu0 %v236, 64
      %v238 = vpop.permute.xlu0 %237
      %v240 = vunpack.c.l.b16 %v232
      %v241 = vpack.c.b16 %v240, %v240
      %242 = vrot.lane.b32.xlu0 %v241, 64
      %v243 = vpop.permute.xlu0 %242
      %v245 = vsel %vm122, %v238, 0
      %v248 = vsel %vm122, %v243, 0
      %250 = vmatprep.subr.bf16.mxu0 0
      %251 = vmatpush1.bf16.xpose.msra.mxu0 0
      %252 = vmatprep.subr.bf16.mxu0 0
      %253 = vmatpush1.bf16.xpose.msra.mxu0 0
      %254 = vmatprep.subr.bf16.mxu0 0
      %255 = vmatpush1.bf16.xpose.msra.mxu0 0
      %256 = vmatprep.subr.bf16.mxu0 0
      %257 = vmatpush1.bf16.xpose.msra.mxu0 0
      %258 = vmatprep.subr.bf16.mxu0 0
      %259 = vmatpush1.bf16.xpose.msra.mxu0 0
      %260 = vmatprep.subr.bf16.mxu0 0
      %261 = vmatpush1.bf16.xpose.msra.mxu0 0
      %262 = vmatprep.subr.bf16.mxu0 0
      %263 = vmatpush1.bf16.xpose.msra.mxu0 0
      %264 = vmatprep.subr.bf16.mxu0 0
      %265 = vmatpush1.bf16.xpose.msra.mxu0 %v248
      %266 = vmatprep.subr.bf16.mxu0 0
      %267 = vmatpush2.bf16.xpose.msra.mxu0 0
      %268 = vmatprep.subr.bf16.mxu0 0
      %269 = vmatpush2.bf16.xpose.msra.mxu0 0
      %270 = vmatprep.subr.bf16.mxu0 0
      %271 = vmatpush2.bf16.xpose.msra.mxu0 0
      %272 = vmatprep.subr.bf16.mxu0 0
      %273 = vmatpush2.bf16.xpose.msra.mxu0 0
      %274 = vmatprep.subr.bf16.mxu0 0
      %275 = vmatpush2.bf16.xpose.msra.mxu0 0
      %276 = vmatprep.subr.bf16.mxu0 0
      %277 = vmatpush2.bf16.xpose.msra.mxu0 0
      %278 = vmatprep.subr.bf16.mxu0 0
      %279 = vmatpush2.bf16.xpose.msra.mxu0 0
      %280 = vmatprep.subr.bf16.mxu0 0
      %281 = vmatpush2.bf16.xpose.msra.mxu0 0
      %282 = vmatprep.mubr.bf16.mxu0 0
      %283 = vmatmul.mubr.bf16.gmra.mxu0 %v245
      %v284 = vpop.f32.mrf.mxu0
      %v285 = vadd.f32 0.0, %v284
      %v286 = vpop.f32.mrf.mxu0
      %v287 = vpop.f32.mrf.mxu0
      %v288 = vpop.f32.mrf.mxu0
      %289 = vdwg.mxu0
      %v290 = vsel %vm118, %v285, -1e+30
      %v291 = vsel %vm170, %v290, -inf
      %292 = vmax.xlane.f32.xlu0 %v291
      %v293 = vpop.xlane.xlu0 %292
      %v294 = vsub.f32 %v290, %v293
      %v295 = vmul.f32 %v294, 1.442695
      %v296 = vpow.pop %v295
      %v297 = vsel %vm170, %v296, 0.0
      %298 = vadd.xlane.f32.xlu0 %v297
      %v299 = vpop.xlane.xlu0 %298
      %v300 = vrcp.pop %v299
      %v301 = vmul.f32 %v296, %v300
      %v302 = vpack.c.bf16 %v301, %v301
      %v304 = vunpack.c.l.b16 %v233
      %v305 = vpack.c.b16 %v304, %v304
      %306 = vrot.lane.b32.xlu0 %v305, 64
      %v307 = vpop.permute.xlu0 %306
      %v309 = vsel %vm170, %v302, 0
      %v312 = vsel %vm186, %v307, 0
      %314 = vmatprep.subr.bf16.mxu0 0
      %315 = vmatpush1.bf16.msra.mxu0 0
      %316 = vmatprep.subr.bf16.mxu0 0
      %317 = vmatpush1.bf16.msra.mxu0 0
      %318 = vmatprep.subr.bf16.mxu0 0
      %319 = vmatpush1.bf16.msra.mxu0 0
      %320 = vmatprep.subr.bf16.mxu0 0
      %321 = vmatpush1.bf16.msra.mxu0 0
      %322 = vmatprep.subr.bf16.mxu0 0
      %323 = vmatpush1.bf16.msra.mxu0 0
      %324 = vmatprep.subr.bf16.mxu0 0
      %325 = vmatpush1.bf16.msra.mxu0 0
      %326 = vmatprep.subr.bf16.mxu0 0
      %327 = vmatpush1.bf16.msra.mxu0 0
      %328 = vmatprep.subr.bf16.mxu0 0
      %329 = vmatpush1.bf16.msra.mxu0 %v312
      %330 = vmatprep.subr.bf16.mxu0 0
      %331 = vmatpush2.bf16.msra.mxu0 0
      %332 = vmatprep.subr.bf16.mxu0 0
      %333 = vmatpush2.bf16.msra.mxu0 0
      %334 = vmatprep.subr.bf16.mxu0 0
      %335 = vmatpush2.bf16.msra.mxu0 0
      %336 = vmatprep.subr.bf16.mxu0 0
      %337 = vmatpush2.bf16.msra.mxu0 0
      %338 = vmatprep.subr.bf16.mxu0 0
      %339 = vmatpush2.bf16.msra.mxu0 0
      %340 = vmatprep.subr.bf16.mxu0 0
      %341 = vmatpush2.bf16.msra.mxu0 0
      %342 = vmatprep.subr.bf16.mxu0 0
      %343 = vmatpush2.bf16.msra.mxu0 0
      %344 = vmatprep.subr.bf16.mxu0 0
      %345 = vmatpush2.bf16.msra.mxu0 0
      %346 = vmatprep.mubr.bf16.mxu0 0
      %347 = vmatmul.mubr.bf16.gmra.mxu0 %v309
      %v348 = vpop.f32.mrf.mxu0
      %v349 = vadd.f32 0.0, %v348
      %v350 = vpop.f32.mrf.mxu0
      %v351 = vpop.f32.mrf.mxu0
      %v352 = vpop.f32.mrf.mxu0
      %353 = vdwg.mxu0
      %355 = vrot.lane.b32.xlu0 %v349, 64
      %v356 = vpop.permute.xlu0 %355
      %vm358 = vcmask 1048064
      %359 = vst.msk [vmem:[#allocation2] sm:$0xff] %vm358, %v356
      %v360 = vld [vmem:[#allocation2] sm:$0xff]
      %v361 = vpack.c.bf16 %v360, %v360
      %362 = vst [vmem:[%s114] sm:$0xf] %v361
      %p363 = scmp.lt.s32.totalorder %s12, 1
      %s364 = scalar_select %p363, %s12, 1
      %s365 = smul.addr %s364, 4
      %s366 = scalar_lea.vmem %s1, %s365
      // Predicated region
      $region25: #{clip_forward.16} parent=23 // pred_check
        %p367 = pneg %p56
      $region26: #{clip_forward.16} parent=23 // pred_check_branch
        %369 = sbr.rel (%p367) target = $region28
      $region27: #{clip_forward.16} parent=23 // pred_region
        _
      $region28: #{clip_forward.16} parent=23 // pred_fallthru
        _
    $region24: #{clip_forward.16} parent=5 // pred_fallthru
      _
    %p370 = scmp.le.s32.totalorder 2, %s7
    // Predicated region
    $region29: #{clip_forward.16} parent=5 // pred_check
      %p371 = pneg %p370
    $region30: #{clip_forward.16} parent=5 // pred_check_branch
      %373 = sbr.rel (%p371) target = $region32
    $region31: #{clip_forward.16} parent=5 // pred_region
      %s374 = ssub.s32 %s7, 2
      // Predicated region
      $region33: #{clip_forward.16} parent=31 // pred_check
        %p375 = pneg %p62
      $region34: #{clip_forward.16} parent=31 // pred_check_branch
        %377 = sbr.rel (%p375) target = $region36
      $region35: #{clip_forward.16} parent=31 // pred_region
        %p378 = scmp.lt.s32.totalorder %s13, 1
        %s379 = scalar_select %p378, %s13, 1
        %s380 = smul.addr %s379, 4
        %s381 = scalar_lea.vmem %s1, %s380
      $region36: #{clip_forward.16} parent=31 // pred_fallthru
        _
    $region32: #{clip_forward.16} parent=5 // pred_fallthru
      _
  $region6: #{clip_forward.16} parent=0 // loop_footer
    %s11 = sadd.s32 1, %s7
  $region7: #{clip_forward.16} parent=0 // loop_footer_branch
    %6 = sbr.rel target = $region3
  $region8: #{clip_forward.16} parent=0 // loop_exit
    _

// kernel: clip_forward.15
$region0: #{clip_forward.15}
  #allocation0 [shape = 'u32[]', space=smem, size = 0x4, offset = 0x4, fixed_abs, tag = 'smem constant byte address 0x4 - core index']
  #allocation1 [shape = 'u32[144,128]{1,0:T(1,128)}', space=vmem, size = 0x12000, scoped, tag = 'internal scratch']
  #allocation2 [shape = 'bf16[16,128]{1,0:T(8,128)(2,1)}', space=vmem, size = 0x1000, scoped, tag = 'scratch operand']
  %s0 = inlined_call_operand.vmem [shape: f32[16,128], index: 0, kind: input, shape index: {}]
  %s1 = inlined_call_operand.vmem [shape: f32[1,128], index: 1, kind: input, shape index: {}]
  %s2 = inlined_call_operand.vmem [shape: f32[1,128], index: 2, kind: input, shape index: {}]
  %s3 = inlined_call_operand.vmem [shape: bf16[128,384], index: 3, kind: input, shape index: {}]
  %s4 = inlined_call_operand.vmem [shape: f32[1,384], index: 4, kind: input, shape index: {}]
  %s5 = inlined_call_operand.vmem [shape: bf16[16,384], index: 5, kind: output, shape index: {}]
  %s6 = sld [smem:[#allocation0]]
  $region34: #{clip_forward.15} parent=0
    _
  %s8 = ssub.s32 1, %s6
  %s9 = scalar_select 0, %s8, %s6
  // Predicated region
  $region2: #{clip_forward.15} parent=0 // pred_check
    _
  $region3: #{clip_forward.15} parent=0 // pred_check_branch
    %11 = sbr.rel (0) target = $region5
  $region4: #{clip_forward.15} parent=0 // pred_region
    _
  $region5: #{clip_forward.15} parent=0 // pred_fallthru
    _
  // Predicated region
  $region6: #{clip_forward.15} parent=0 // pred_check
    _
  $region7: #{clip_forward.15} parent=0 // pred_check_branch
    %13 = sbr.rel (0) target = $region9
  $region8: #{clip_forward.15} parent=0 // pred_region
    _
  $region9: #{clip_forward.15} parent=0 // pred_fallthru
    _
  // Predicated region
  $region10: #{clip_forward.15} parent=0 // pred_check
    _
  $region11: #{clip_forward.15} parent=0 // pred_check_branch
    %15 = sbr.rel (0) target = $region13
  $region12: #{clip_forward.15} parent=0 // pred_region
    _
  $region13: #{clip_forward.15} parent=0 // pred_fallthru
    _
  // Predicated region
  $region14: #{clip_forward.15} parent=0 // pred_check
    _
  $region15: #{clip_forward.15} parent=0 // pred_check_branch
    %17 = sbr.rel (0) target = $region17
  $region16: #{clip_forward.15} parent=0 // pred_region
    _
  $region17: #{clip_forward.15} parent=0 // pred_fallthru
    _
  // Predicated region
  $region18: #{clip_forward.15} parent=0 // pred_check
    _
  $region19: #{clip_forward.15} parent=0 // pred_check_branch
    %19 = sbr.rel (0) target = $region21
  $region20: #{clip_forward.15} parent=0 // pred_region
    _
  $region21: #{clip_forward.15} parent=0 // pred_fallthru
    _
  %p21 = scmp.eq.s32.totalorder 0, 0
  // Predicated region
  $region22: #{clip_forward.15} parent=0 // pred_check
    %p22 = pneg %p21
  $region23: #{clip_forward.15} parent=0 // pred_check_branch
    %24 = sbr.rel (%p22) target = $region25
  $region24: #{clip_forward.15} parent=0 // pred_region
    %v25 = vld [vmem:[%s0] sm:$0xff]
    %v26 = vld [vmem:[%s0 + $0x8] sm:$0xff]
    %27 = vadd.xlane.f32.xlu0 %v25
    %v28 = vpop.xlane.xlu0 %27
    %29 = vadd.xlane.f32.xlu0 %v26
    %v30 = vpop.xlane.xlu0 %29
    %v31 = vrcp.pop 128.0
    %v32 = vmul.f32 %v28, %v31
    %v33 = vmul.f32 %v30, %v31
    %v34 = vsub.f32 %v25, %v32
    %v35 = vsub.f32 %v26, %v33
    %v36 = vmul.f32 %v34, %v34
    %v37 = vmul.f32 %v35, %v35
    %38 = vadd.xlane.f32.xlu0 %v36
    %v39 = vpop.xlane.xlu0 %38
    %40 = vadd.xlane.f32.xlu0 %v37
    %v41 = vpop.xlane.xlu0 %40
    %v42 = vmul.f32 %v39, %v31
    %v43 = vmul.f32 %v41, %v31
    %v44 = vadd.f32 %v42, 1e-05
    %v45 = vadd.f32 %v43, 1e-05
    %v46 = vrsqrt.pop %v44
    %v47 = vrsqrt.pop %v45
    %v48 = vmul.f32 %v34, %v46
    %v49 = vmul.f32 %v35, %v47
    %v50 = vld [vmem:[%s1] sm:$0x1]
    %v52 = vlaneseq
    %v53 = vshrl.u32 %v52, 7
    %v54 = vsub.s32 0, %v53
    %v55 = vrot.slane %v50, %v54
    %v57 = vmul.f32 %v48, %v55
    %v58 = vmul.f32 %v49, %v55
    %v59 = vld [vmem:[%s2] sm:$0x1]
    %v61 = vlaneseq
    %v62 = vshrl.u32 %v61, 7
    %v63 = vsub.s32 0, %v62
    %v64 = vrot.slane %v59, %v63
    %v66 = vadd.f32 %v57, %v64
    %v67 = vadd.f32 %v58, %v64
    %v68 = vpack.c.bf16 %v67, %v66
    %v70 = vunpack.c.l.b16 %v68
    %v71 = vunpack.c.h.b16 %v68
    %v72 = vpack.c.b16 %v70, %v70
    %v73 = vpack.c.b16 %v71, %v71
    %76 = vst [vmem:[#allocation2] sm:$0xf] %v72
    %77 = vst [vmem:[#allocation2 + $0x4] sm:$0xf] %v73
  $region25: #{clip_forward.15} parent=0 // pred_fallthru
    _
  %v78 = vld [vmem:[#allocation2] sm:$0xf]
  %v79 = vld [vmem:[#allocation2 + $0x4] sm:$0xf]
  %v80 = vld [vmem:[%s3] sm:$0xff]
  %v81 = vld [vmem:[%s3 + $0x8] sm:$0xf]
  %v82 = vld [vmem:[%s3 + $0xc] sm:$0xff]
  %v83 = vld [vmem:[%s3 + $0x14] sm:$0xf]
  %v84 = vld [vmem:[%s3 + $0x18] sm:$0xff]
  %v85 = vld [vmem:[%s3 + $0x20] sm:$0xf]
  %v86 = vld [vmem:[%s3 + $0x24] sm:$0xff]
  %v87 = vld [vmem:[%s3 + $0x2c] sm:$0xf]
  %v88 = vld [vmem:[%s3 + $0x30] sm:$0xff]
  %v89 = vld [vmem:[%s3 + $0x38] sm:$0xf]
  %v90 = vld [vmem:[%s3 + $0x3c] sm:$0xff]
  %v91 = vld [vmem:[%s3 + $0x44] sm:$0xf]
  %v92 = vld [vmem:[%s3 + $0x48] sm:$0xff]
  %v93 = vld [vmem:[%s3 + $0x50] sm:$0xf]
  %v94 = vld [vmem:[%s3 + $0x54] sm:$0xff]
  %v95 = vld [vmem:[%s3 + $0x5c] sm:$0xf]
  %v96 = vld [vmem:[%s3 + $0x60] sm:$0xff]
  %v97 = vld [vmem:[%s3 + $0x68] sm:$0xf]
  %v98 = vld [vmem:[%s3 + $0x6c] sm:$0xff]
  %v99 = vld [vmem:[%s3 + $0x74] sm:$0xf]
  %v100 = vld [vmem:[%s3 + $0x78] sm:$0xff]
  %v101 = vld [vmem:[%s3 + $0x80] sm:$0xf]
  %v102 = vld [vmem:[%s3 + $0x84] sm:$0xff]
  %v103 = vld [vmem:[%s3 + $0x8c] sm:$0xf]
  %v104 = vld [vmem:[%s3 + $0x90] sm:$0xff]
  %v105 = vld [vmem:[%s3 + $0x98] sm:$0xf]
  %v106 = vld [vmem:[%s3 + $0x9c] sm:$0xff]
  %v107 = vld [vmem:[%s3 + $0xa4] sm:$0xf]
  %v108 = vld [vmem:[%s3 + $0xa8] sm:$0xff]
  %v109 = vld [vmem:[%s3 + $0xb0] sm:$0xf]
  %v110 = vld [vmem:[%s3 + $0xb4] sm:$0xff]
  %v111 = vld [vmem:[%s3 + $0xbc] sm:$0xf]
  %v112 = vld [vmem:[%s4] sm:$0x7]
  %v114 = vlaneseq
  %v115 = vshrl.u32 %v114, 7
  %v116 = vsub.s32 0, %v115
  %v117 = vrot.slane %v112, %v116
  %v118 = vlaneseq
  %v119 = vshrl.u32 %v118, 7
  %v120 = vsub.s32 1, %v119
  %v121 = vrot.slane %v112, %v120
  %v122 = vlaneseq
  %v123 = vshrl.u32 %v122, 7
  %v124 = vsub.s32 2, %v123
  %v125 = vrot.slane %v112, %v124
  %v131 = vunpack.c.l.b16 %v78
  %v132 = vunpack.c.l.b16 %v79
  %v133 = vpack.c.b16 %v132, %v131
  %v167 = vunpack.c.l.b16 %v80
  %v168 = vunpack.c.h.b16 %v80
  %v169 = vunpack.c.l.b16 %v81
  %v170 = vunpack.c.l.b16 %v82
  %v171 = vunpack.c.h.b16 %v82
  %v172 = vunpack.c.l.b16 %v83
  %v173 = vunpack.c.l.b16 %v84
  %v174 = vunpack.c.h.b16 %v84
  %v175 = vunpack.c.l.b16 %v85
  %v176 = vunpack.c.l.b16 %v86
  %v177 = vunpack.c.h.b16 %v86
  %v178 = vunpack.c.l.b16 %v87
  %v179 = vunpack.c.l.b16 %v88
  %v180 = vunpack.c.h.b16 %v88
  %v181 = vunpack.c.l.b16 %v89
  %v182 = vunpack.c.l.b16 %v90
  %v183 = vunpack.c.h.b16 %v90
  %v184 = vunpack.c.l.b16 %v91
  %v185 = vunpack.c.l.b16 %v92
  %v186 = vunpack.c.h.b16 %v92
  %v187 = vunpack.c.l.b16 %v93
  %v188 = vunpack.c.l.b16 %v94
  %v189 = vunpack.c.h.b16 %v94
  %v190 = vunpack.c.l.b16 %v95
  %v191 = vunpack.c.l.b16 %v96
  %v192 = vunpack.c.h.b16 %v96
  %v193 = vunpack.c.l.b16 %v97
  %v194 = vunpack.c.l.b16 %v98
  %v195 = vunpack.c.h.b16 %v98
  %v196 = vunpack.c.l.b16 %v99
  %v197 = vunpack.c.l.b16 %v100
  %v198 = vunpack.c.h.b16 %v100
  %v199 = vunpack.c.l.b16 %v101
  %v200 = vunpack.c.l.b16 %v102
  %v201 = vunpack.c.h.b16 %v102
  %v202 = vunpack.c.l.b16 %v103
  %v203 = vunpack.c.l.b16 %v104
  %v204 = vunpack.c.h.b16 %v104
  %v205 = vunpack.c.l.b16 %v105
  %v206 = vunpack.c.l.b16 %v106
  %v207 = vunpack.c.h.b16 %v106
  %v208 = vunpack.c.l.b16 %v107
  %v209 = vunpack.c.l.b16 %v108
  %v210 = vunpack.c.h.b16 %v108
  %v211 = vunpack.c.l.b16 %v109
  %v212 = vunpack.c.l.b16 %v110
  %v213 = vunpack.c.h.b16 %v110
  %v214 = vunpack.c.l.b16 %v111
  %v215 = vpack.c.b16 %v170, %v167
  %v216 = vpack.c.b16 %v171, %v168
  %v217 = vpack.c.b16 %v172, %v169
  %v218 = vpack.c.b16 %v176, %v173
  %v219 = vpack.c.b16 %v177, %v174
  %v220 = vpack.c.b16 %v178, %v175
  %v221 = vpack.c.b16 %v182, %v179
  %v222 = vpack.c.b16 %v183, %v180
  %v223 = vpack.c.b16 %v184, %v181
  %v224 = vpack.c.b16 %v188, %v185
  %v225 = vpack.c.b16 %v189, %v186
  %v226 = vpack.c.b16 %v190, %v187
  %v227 = vpack.c.b16 %v194, %v191
  %v228 = vpack.c.b16 %v195, %v192
  %v229 = vpack.c.b16 %v196, %v193
  %v230 = vpack.c.b16 %v200, %v197
  %v231 = vpack.c.b16 %v201, %v198
  %v232 = vpack.c.b16 %v202, %v199
  %v233 = vpack.c.b16 %v206, %v203
  %v234 = vpack.c.b16 %v207, %v204
  %v235 = vpack.c.b16 %v208, %v205
  %v236 = vpack.c.b16 %v212, %v209
  %v237 = vpack.c.b16 %v213, %v210
  %v238 = vpack.c.b16 %v214, %v211
  %263 = vmatprep.subr.bf16.mxu0 %v237
  %264 = vmatpush1.bf16.msra.mxu0 %v236
  %265 = vmatprep.subr.bf16.mxu0 %v234
  %266 = vmatpush1.bf16.msra.mxu0 %v233
  %267 = vmatprep.subr.bf16.mxu0 %v231
  %268 = vmatpush1.bf16.msra.mxu0 %v230
  %269 = vmatprep.subr.bf16.mxu0 %v228
  %270 = vmatpush1.bf16.msra.mxu0 %v227
  %271 = vmatprep.subr.bf16.mxu0 %v225
  %272 = vmatpush1.bf16.msra.mxu0 %v224
  %273 = vmatprep.subr.bf16.mxu0 %v222
  %274 = vmatpush1.bf16.msra.mxu0 %v221
  %275 = vmatprep.subr.bf16.mxu0 %v219
  %276 = vmatpush1.bf16.msra.mxu0 %v218
  %277 = vmatprep.subr.bf16.mxu0 %v216
  %278 = vmatpush1.bf16.msra.mxu0 %v215
  %279 = vmatprep.subr.bf16.mxu0 0
  %280 = vmatpush2.bf16.msra.mxu0 0
  %281 = vmatprep.subr.bf16.mxu0 0
  %282 = vmatpush2.bf16.msra.mxu0 0
  %283 = vmatprep.subr.bf16.mxu0 0
  %284 = vmatpush2.bf16.msra.mxu0 0
  %285 = vmatprep.subr.bf16.mxu0 0
  %286 = vmatpush2.bf16.msra.mxu0 0
  %287 = vmatprep.subr.bf16.mxu0 0
  %288 = vmatpush2.bf16.msra.mxu0 0
  %289 = vmatprep.subr.bf16.mxu0 0
  %290 = vmatpush2.bf16.msra.mxu0 0
  %291 = vmatprep.subr.bf16.mxu0 0
  %292 = vmatpush2.bf16.msra.mxu0 0
  %293 = vmatprep.subr.bf16.mxu0 0
  %294 = vmatpush2.bf16.msra.mxu0 0
  %295 = vmatprep.mubr.bf16.mxu0 0
  %296 = vmatmul.mubr.bf16.gmra.mxu0 %v133
  %v297 = vpop.f32.mrf.mxu0
  %v298 = vadd.f32 %v117, %v297
  %v299 = vpop.f32.mrf.mxu0
  %v300 = vadd.f32 %v121, %v299
  %v301 = vpop.f32.mrf.mxu0
  %v302 = vadd.f32 %v117, %v301
  %v303 = vpop.f32.mrf.mxu0
  %v304 = vadd.f32 %v121, %v303
  %305 = vdwg.mxu0
  %306 = vmatprep.subr.bf16.mxu0 0
  %307 = vmatpush1.bf16.msra.mxu0 %v238
  %308 = vmatprep.subr.bf16.mxu0 0
  %309 = vmatpush1.bf16.msra.mxu0 %v235
  %310 = vmatprep.subr.bf16.mxu0 0
  %311 = vmatpush1.bf16.msra.mxu0 %v232
  %312 = vmatprep.subr.bf16.mxu0 0
  %313 = vmatpush1.bf16.msra.mxu0 %v229
  %314 = vmatprep.subr.bf16.mxu0 0
  %315 = vmatpush1.bf16.msra.mxu0 %v226
  %316 = vmatprep.subr.bf16.mxu0 0
  %317 = vmatpush1.bf16.msra.mxu0 %v223
  %318 = vmatprep.subr.bf16.mxu0 0
  %319 = vmatpush1.bf16.msra.mxu0 %v220
  %320 = vmatprep.subr.bf16.mxu0 0
  %321 = vmatpush1.bf16.msra.mxu0 %v217
  %322 = vmatprep.subr.bf16.mxu0 0
  %323 = vmatpush2.bf16.msra.mxu0 0
  %324 = vmatprep.subr.bf16.mxu0 0
  %325 = vmatpush2.bf16.msra.mxu0 0
  %326 = vmatprep.subr.bf16.mxu0 0
  %327 = vmatpush2.bf16.msra.mxu0 0
  %328 = vmatprep.subr.bf16.mxu0 0
  %329 = vmatpush2.bf16.msra.mxu0 0
  %330 = vmatprep.subr.bf16.mxu0 0
  %331 = vmatpush2.bf16.msra.mxu0 0
  %332 = vmatprep.subr.bf16.mxu0 0
  %333 = vmatpush2.bf16.msra.mxu0 0
  %334 = vmatprep.subr.bf16.mxu0 0
  %335 = vmatpush2.bf16.msra.mxu0 0
  %336 = vmatprep.subr.bf16.mxu0 0
  %337 = vmatpush2.bf16.msra.mxu0 0
  %338 = vmatprep.mubr.bf16.mxu0 0
  %339 = vmatmul.mubr.bf16.gmra.mxu0 %v133
  %v340 = vpop.f32.mrf.mxu0
  %v341 = vadd.f32 %v125, %v340
  %v342 = vpop.f32.mrf.mxu0
  %v343 = vpop.f32.mrf.mxu0
  %v344 = vadd.f32 %v125, %v343
  %v345 = vpop.f32.mrf.mxu0
  %346 = vdwg.mxu0
  %v347 = vpack.c.bf16 %v302, %v298
  %v348 = vpack.c.bf16 %v304, %v300
  %v349 = vpack.c.bf16 %v344, %v341
  %v353 = vunpack.c.l.b16 %v347
  %v354 = vunpack.c.l.b16 %v348
  %v355 = vunpack.c.l.b16 %v349
  %v356 = vunpack.c.h.b16 %v347
  %v357 = vunpack.c.h.b16 %v348
  %v358 = vunpack.c.h.b16 %v349
  %v359 = vpack.c.b16 %v354, %v353
  %v360 = vpack.c.b16 %v355, %v355
  %v361 = vpack.c.b16 %v357, %v356
  %v362 = vpack.c.b16 %v358, %v358
  %367 = vst [vmem:[%s5] sm:$0xff] %v359
  %368 = vst [vmem:[%s5 + $0x8] sm:$0xf] %v360
  %369 = vst [vmem:[%s5 + $0xc] sm:$0xff] %v361
  %370 = vst [vmem:[%s5 + $0x14] sm:$0xf] %v362
  // Predicated region
  $region26: #{clip_forward.15} parent=0 // pred_check
    _
  $region27: #{clip_forward.15} parent=0 // pred_check_branch
    %372 = sbr.rel (0) target = $region29
  $region28: #{clip_forward.15} parent=0 // pred_region
    _
  $region29: #{clip_forward.15} parent=0 // pred_fallthru
    _
  // Predicated region
  $region30: #{clip_forward.15} parent=0 // pred_check
    _
  $region31: #{clip_forward.15} parent=0 // pred_check_branch
    %374 = sbr.rel (0) target = $region33
  $region32: #{clip_forward.15} parent=0 // pred_region
    _
  $region33: #{clip_forward.15} parent=0 // pred_fallthru
    _

// kernel: clip_forward.17
$region0: #{clip_forward.17}
  #allocation0 [shape = 'u32[]', space=smem, size = 0x4, offset = 0x4, fixed_abs, tag = 'smem constant byte address 0x4 - core index']
  #allocation1 [shape = 'u32[144,128]{1,0:T(1,128)}', space=vmem, size = 0x12000, scoped, tag = 'internal scratch']
  #allocation2 [shape = 'f32[16,128]{1,0:T(8,128)}', space=vmem, size = 0x2000, scoped, tag = 'scratch operand']
  %s0 = inlined_call_operand.vmem [shape: bf16[16,128], index: 0, kind: input, shape index: {}]
  %s1 = inlined_call_operand.vmem [shape: bf16[128,128], index: 1, kind: input, shape index: {}]
  %s2 = inlined_call_operand.vmem [shape: f32[1,128], index: 2, kind: input, shape index: {}]
  %s3 = inlined_call_operand.vmem [shape: f32[16,128], index: 3, kind: input, shape index: {}, may-alias: {3,4}]
  %s4 = inlined_call_operand.vmem [shape: f32[16,128], index: 4, kind: output, shape index: {}, may-alias: {3,4}]
  %s5 = sld [smem:[#allocation0]]
  $region34: #{clip_forward.17} parent=0
    _
  %s7 = ssub.s32 1, %s5
  %s8 = scalar_select 0, %s7, %s5
  // Predicated region
  $region2: #{clip_forward.17} parent=0 // pred_check
    _
  $region3: #{clip_forward.17} parent=0 // pred_check_branch
    %10 = sbr.rel (0) target = $region5
  $region4: #{clip_forward.17} parent=0 // pred_region
    _
  $region5: #{clip_forward.17} parent=0 // pred_fallthru
    _
  // Predicated region
  $region6: #{clip_forward.17} parent=0 // pred_check
    _
  $region7: #{clip_forward.17} parent=0 // pred_check_branch
    %12 = sbr.rel (0) target = $region9
  $region8: #{clip_forward.17} parent=0 // pred_region
    _
  $region9: #{clip_forward.17} parent=0 // pred_fallthru
    _
  // Predicated region
  $region10: #{clip_forward.17} parent=0 // pred_check
    _
  $region11: #{clip_forward.17} parent=0 // pred_check_branch
    %14 = sbr.rel (0) target = $region13
  $region12: #{clip_forward.17} parent=0 // pred_region
    _
  $region13: #{clip_forward.17} parent=0 // pred_fallthru
    _
  // Predicated region
  $region14: #{clip_forward.17} parent=0 // pred_check
    _
  $region15: #{clip_forward.17} parent=0 // pred_check_branch
    %16 = sbr.rel (0) target = $region17
  $region16: #{clip_forward.17} parent=0 // pred_region
    _
  $region17: #{clip_forward.17} parent=0 // pred_fallthru
    _
  %p18 = scmp.eq.s32.totalorder 0, 0
  // Predicated region
  $region18: #{clip_forward.17} parent=0 // pred_check
    %p19 = pneg %p18
  $region19: #{clip_forward.17} parent=0 // pred_check_branch
    %21 = sbr.rel (%p19) target = $region21
  $region20: #{clip_forward.17} parent=0 // pred_region
    %v22 = vld [vmem:[%s3] sm:$0xff]
    %v23 = vld [vmem:[%s3 + $0x8] sm:$0xff]
    %24 = vst [vmem:[#allocation2] sm:$0xff] %v22
    %25 = vst [vmem:[#allocation2 + $0x8] sm:$0xff] %v23
  $region21: #{clip_forward.17} parent=0 // pred_fallthru
    _
  %v26 = vld [vmem:[#allocation2] sm:$0xff]
  %v27 = vld [vmem:[#allocation2 + $0x8] sm:$0xff]
  %v28 = vld [vmem:[%s0] sm:$0xf]
  %v29 = vld [vmem:[%s0 + $0x4] sm:$0xf]
  %v30 = vld [vmem:[%s1] sm:$0xf]
  %v31 = vld [vmem:[%s1 + $0x4] sm:$0xf]
  %v32 = vld [vmem:[%s1 + $0x8] sm:$0xf]
  %v33 = vld [vmem:[%s1 + $0xc] sm:$0xf]
  %v34 = vld [vmem:[%s1 + $0x10] sm:$0xf]
  %v35 = vld [vmem:[%s1 + $0x14] sm:$0xf]
  %v36 = vld [vmem:[%s1 + $0x18] sm:$0xf]
  %v37 = vld [vmem:[%s1 + $0x1c] sm:$0xf]
  %v38 = vld [vmem:[%s1 + $0x20] sm:$0xf]
  %v39 = vld [vmem:[%s1 + $0x24] sm:$0xf]
  %v40 = vld [vmem:[%s1 + $0x28] sm:$0xf]
  %v41 = vld [vmem:[%s1 + $0x2c] sm:$0xf]
  %v42 = vld [vmem:[%s1 + $0x30] sm:$0xf]
  %v43 = vld [vmem:[%s1 + $0x34] sm:$0xf]
  %v44 = vld [vmem:[%s1 + $0x38] sm:$0xf]
  %v45 = vld [vmem:[%s1 + $0x3c] sm:$0xf]
  %v48 = vunpack.c.l.b16 %v28
  %v49 = vunpack.c.l.b16 %v29
  %v50 = vpack.c.b16 %v49, %v48
  %v68 = vunpack.c.l.b16 %v30
  %v69 = vunpack.c.l.b16 %v31
  %v70 = vunpack.c.l.b16 %v32
  %v71 = vunpack.c.l.b16 %v33
  %v72 = vunpack.c.l.b16 %v34
  %v73 = vunpack.c.l.b16 %v35
  %v74 = vunpack.c.l.b16 %v36
  %v75 = vunpack.c.l.b16 %v37
  %v76 = vunpack.c.l.b16 %v38
  %v77 = vunpack.c.l.b16 %v39
  %v78 = vunpack.c.l.b16 %v40
  %v79 = vunpack.c.l.b16 %v41
  %v80 = vunpack.c.l.b16 %v42
  %v81 = vunpack.c.l.b16 %v43
  %v82 = vunpack.c.l.b16 %v44
  %v83 = vunpack.c.l.b16 %v45
  %v84 = vpack.c.b16 %v69, %v68
  %v85 = vpack.c.b16 %v71, %v70
  %v86 = vpack.c.b16 %v73, %v72
  %v87 = vpack.c.b16 %v75, %v74
  %v88 = vpack.c.b16 %v77, %v76
  %v89 = vpack.c.b16 %v79, %v78
  %v90 = vpack.c.b16 %v81, %v80
  %v91 = vpack.c.b16 %v83, %v82
  %100 = vmatprep.subr.bf16.mxu0 0
  %101 = vmatpush1.bf16.msra.mxu0 %v91
  %102 = vmatprep.subr.bf16.mxu0 0
  %103 = vmatpush1.bf16.msra.mxu0 %v90
  %104 = vmatprep.subr.bf16.mxu0 0
  %105 = vmatpush1.bf16.msra.mxu0 %v89
  %106 = vmatprep.subr.bf16.mxu0 0
  %107 = vmatpush1.bf16.msra.mxu0 %v88
  %108 = vmatprep.subr.bf16.mxu0 0
  %109 = vmatpush1.bf16.msra.mxu0 %v87
  %110 = vmatprep.subr.bf16.mxu0 0
  %111 = vmatpush1.bf16.msra.mxu0 %v86
  %112 = vmatprep.subr.bf16.mxu0 0
  %113 = vmatpush1.bf16.msra.mxu0 %v85
  %114 = vmatprep.subr.bf16.mxu0 0
  %115 = vmatpush1.bf16.msra.mxu0 %v84
  %116 = vmatprep.subr.bf16.mxu0 0
  %117 = vmatpush2.bf16.msra.mxu0 0
  %118 = vmatprep.subr.bf16.mxu0 0
  %119 = vmatpush2.bf16.msra.mxu0 0
  %120 = vmatprep.subr.bf16.mxu0 0
  %121 = vmatpush2.bf16.msra.mxu0 0
  %122 = vmatprep.subr.bf16.mxu0 0
  %123 = vmatpush2.bf16.msra.mxu0 0
  %124 = vmatprep.subr.bf16.mxu0 0
  %125 = vmatpush2.bf16.msra.mxu0 0
  %126 = vmatprep.subr.bf16.mxu0 0
  %127 = vmatpush2.bf16.msra.mxu0 0
  %128 = vmatprep.subr.bf16.mxu0 0
  %129 = vmatpush2.bf16.msra.mxu0 0
  %130 = vmatprep.subr.bf16.mxu0 0
  %131 = vmatpush2.bf16.msra.mxu0 0
  %132 = vmatprep.mubr.bf16.mxu0 0
  %133 = vmatmul.mubr.bf16.gmra.mxu0 %v50
  %v134 = vpop.f32.mrf.mxu0
  %v135 = vadd.f32 0.0, %v134
  %v136 = vpop.f32.mrf.mxu0
  %v137 = vpop.f32.mrf.mxu0
  %v138 = vadd.f32 0.0, %v137
  %v139 = vpop.f32.mrf.mxu0
  %140 = vdwg.mxu0
  %v141 = vadd.f32 %v26, %v135
  %v142 = vadd.f32 %v27, %v138
  %143 = vst [vmem:[#allocation2] sm:$0xff] %v141
  %144 = vst [vmem:[#allocation2 + $0x8] sm:$0xff] %v142
  // Predicated region
  $region22: #{clip_forward.17} parent=0 // pred_check
    %p145 = pneg %p18
  $region23: #{clip_forward.17} parent=0 // pred_check_branch
    %147 = sbr.rel (%p145) target = $region25
  $region24: #{clip_forward.17} parent=0 // pred_region
    %v148 = vld [vmem:[#allocation2] sm:$0xff]
    %v149 = vld [vmem:[#allocation2 + $0x8] sm:$0xff]
    %v150 = vld [vmem:[%s2] sm:$0x1]
    %v152 = vlaneseq
    %v153 = vshrl.u32 %v152, 7
    %v154 = vsub.s32 0, %v153
    %v155 = vrot.slane %v150, %v154
    %v157 = vadd.f32 %v148, %v155
    %v158 = vadd.f32 %v149, %v155
    %159 = vst [vmem:[%s4] sm:$0xff] %v157
    %160 = vst [vmem:[%s4 + $0x8] sm:$0xff] %v158
  $region25: #{clip_forward.17} parent=0 // pred_fallthru
    _
  // Predicated region
  $region26: #{clip_forward.17} parent=0 // pred_check
    _
  $region27: #{clip_forward.17} parent=0 // pred_check_branch
    %162 = sbr.rel (0) target = $region29
  $region28: #{clip_forward.17} parent=0 // pred_region
    _
  $region29: #{clip_forward.17} parent=0 // pred_fallthru
    _
  // Predicated region
  $region30: #{clip_forward.17} parent=0 // pred_check
    _
  $region31: #{clip_forward.17} parent=0 // pred_check_branch
    %164 = sbr.rel (0) target = $region33
  $region32: #{clip_forward.17} parent=0 // pred_region
    _
  $region33: #{clip_forward.17} parent=0 // pred_fallthru
    _

// kernel: clip_forward.18
$region0: #{clip_forward.18}
  #allocation0 [shape = 'u32[]', space=smem, size = 0x4, offset = 0x4, fixed_abs, tag = 'smem constant byte address 0x4 - core index']
  #allocation1 [shape = 'u32[144,128]{1,0:T(1,128)}', space=vmem, size = 0x12000, scoped, tag = 'internal scratch']
  #allocation2 [shape = 'bf16[16,128]{1,0:T(8,128)(2,1)}', space=vmem, size = 0x1000, scoped, tag = 'scratch operand']
  %s0 = inlined_call_operand.vmem [shape: f32[16,128], index: 0, kind: input, shape index: {}]
  %s1 = inlined_call_operand.vmem [shape: f32[1,128], index: 1, kind: input, shape index: {}]
  %s2 = inlined_call_operand.vmem [shape: f32[1,128], index: 2, kind: input, shape index: {}]
  %s3 = inlined_call_operand.vmem [shape: bf16[128,512], index: 3, kind: input, shape index: {}]
  %s4 = inlined_call_operand.vmem [shape: f32[1,512], index: 4, kind: input, shape index: {}]
  %s5 = inlined_call_operand.vmem [shape: bf16[16,512], index: 5, kind: output, shape index: {}]
  %s6 = sld [smem:[#allocation0]]
  $region34: #{clip_forward.18} parent=0
    _
  %s8 = ssub.s32 1, %s6
  %s9 = scalar_select 0, %s8, %s6
  // Predicated region
  $region2: #{clip_forward.18} parent=0 // pred_check
    _
  $region3: #{clip_forward.18} parent=0 // pred_check_branch
    %11 = sbr.rel (0) target = $region5
  $region4: #{clip_forward.18} parent=0 // pred_region
    _
  $region5: #{clip_forward.18} parent=0 // pred_fallthru
    _
  // Predicated region
  $region6: #{clip_forward.18} parent=0 // pred_check
    _
  $region7: #{clip_forward.18} parent=0 // pred_check_branch
    %13 = sbr.rel (0) target = $region9
  $region8: #{clip_forward.18} parent=0 // pred_region
    _
  $region9: #{clip_forward.18} parent=0 // pred_fallthru
    _
  // Predicated region
  $region10: #{clip_forward.18} parent=0 // pred_check
    _
  $region11: #{clip_forward.18} parent=0 // pred_check_branch
    %15 = sbr.rel (0) target = $region13
  $region12: #{clip_forward.18} parent=0 // pred_region
    _
  $region13: #{clip_forward.18} parent=0 // pred_fallthru
    _
  // Predicated region
  $region14: #{clip_forward.18} parent=0 // pred_check
    _
  $region15: #{clip_forward.18} parent=0 // pred_check_branch
    %17 = sbr.rel (0) target = $region17
  $region16: #{clip_forward.18} parent=0 // pred_region
    _
  $region17: #{clip_forward.18} parent=0 // pred_fallthru
    _
  // Predicated region
  $region18: #{clip_forward.18} parent=0 // pred_check
    _
  $region19: #{clip_forward.18} parent=0 // pred_check_branch
    %19 = sbr.rel (0) target = $region21
  $region20: #{clip_forward.18} parent=0 // pred_region
    _
  $region21: #{clip_forward.18} parent=0 // pred_fallthru
    _
  %p21 = scmp.eq.s32.totalorder 0, 0
  // Predicated region
  $region22: #{clip_forward.18} parent=0 // pred_check
    %p22 = pneg %p21
  $region23: #{clip_forward.18} parent=0 // pred_check_branch
    %24 = sbr.rel (%p22) target = $region25
  $region24: #{clip_forward.18} parent=0 // pred_region
    %v25 = vld [vmem:[%s0] sm:$0xff]
    %v26 = vld [vmem:[%s0 + $0x8] sm:$0xff]
    %27 = vadd.xlane.f32.xlu0 %v25
    %v28 = vpop.xlane.xlu0 %27
    %29 = vadd.xlane.f32.xlu0 %v26
    %v30 = vpop.xlane.xlu0 %29
    %v31 = vrcp.pop 128.0
    %v32 = vmul.f32 %v28, %v31
    %v33 = vmul.f32 %v30, %v31
    %v34 = vsub.f32 %v25, %v32
    %v35 = vsub.f32 %v26, %v33
    %v36 = vmul.f32 %v34, %v34
    %v37 = vmul.f32 %v35, %v35
    %38 = vadd.xlane.f32.xlu0 %v36
    %v39 = vpop.xlane.xlu0 %38
    %40 = vadd.xlane.f32.xlu0 %v37
    %v41 = vpop.xlane.xlu0 %40
    %v42 = vmul.f32 %v39, %v31
    %v43 = vmul.f32 %v41, %v31
    %v44 = vadd.f32 %v42, 1e-05
    %v45 = vadd.f32 %v43, 1e-05
    %v46 = vrsqrt.pop %v44
    %v47 = vrsqrt.pop %v45
    %v48 = vmul.f32 %v34, %v46
    %v49 = vmul.f32 %v35, %v47
    %v50 = vld [vmem:[%s1] sm:$0x1]
    %v52 = vlaneseq
    %v53 = vshrl.u32 %v52, 7
    %v54 = vsub.s32 0, %v53
    %v55 = vrot.slane %v50, %v54
    %v57 = vmul.f32 %v48, %v55
    %v58 = vmul.f32 %v49, %v55
    %v59 = vld [vmem:[%s2] sm:$0x1]
    %v61 = vlaneseq
    %v62 = vshrl.u32 %v61, 7
    %v63 = vsub.s32 0, %v62
    %v64 = vrot.slane %v59, %v63
    %v66 = vadd.f32 %v57, %v64
    %v67 = vadd.f32 %v58, %v64
    %v68 = vpack.c.bf16 %v67, %v66
    %v70 = vunpack.c.l.b16 %v68
    %v71 = vunpack.c.h.b16 %v68
    %v72 = vpack.c.b16 %v70, %v70
    %v73 = vpack.c.b16 %v71, %v71
    %76 = vst [vmem:[#allocation2] sm:$0xf] %v72
    %77 = vst [vmem:[#allocation2 + $0x4] sm:$0xf] %v73
  $region25: #{clip_forward.18} parent=0 // pred_fallthru
    _
  %v78 = vld [vmem:[#allocation2] sm:$0xf]
  %v79 = vld [vmem:[#allocation2 + $0x4] sm:$0xf]
  %v80 = vld [vmem:[%s3] sm:$0xff]
  %v81 = vld [vmem:[%s3 + $0x8] sm:$0xff]
  %v82 = vld [vmem:[%s3 + $0x10] sm:$0xff]
  %v83 = vld [vmem:[%s3 + $0x18] sm:$0xff]
  %v84 = vld [vmem:[%s3 + $0x20] sm:$0xff]
  %v85 = vld [vmem:[%s3 + $0x28] sm:$0xff]
  %v86 = vld [vmem:[%s3 + $0x30] sm:$0xff]
  %v87 = vld [vmem:[%s3 + $0x38] sm:$0xff]
  %v88 = vld [vmem:[%s3 + $0x40] sm:$0xff]
  %v89 = vld [vmem:[%s3 + $0x48] sm:$0xff]
  %v90 = vld [vmem:[%s3 + $0x50] sm:$0xff]
  %v91 = vld [vmem:[%s3 + $0x58] sm:$0xff]
  %v92 = vld [vmem:[%s3 + $0x60] sm:$0xff]
  %v93 = vld [vmem:[%s3 + $0x68] sm:$0xff]
  %v94 = vld [vmem:[%s3 + $0x70] sm:$0xff]
  %v95 = vld [vmem:[%s3 + $0x78] sm:$0xff]
  %v96 = vld [vmem:[%s3 + $0x80] sm:$0xff]
  %v97 = vld [vmem:[%s3 + $0x88] sm:$0xff]
  %v98 = vld [vmem:[%s3 + $0x90] sm:$0xff]
  %v99 = vld [vmem:[%s3 + $0x98] sm:$0xff]
  %v100 = vld [vmem:[%s3 + $0xa0] sm:$0xff]
  %v101 = vld [vmem:[%s3 + $0xa8] sm:$0xff]
  %v102 = vld [vmem:[%s3 + $0xb0] sm:$0xff]
  %v103 = vld [vmem:[%s3 + $0xb8] sm:$0xff]
  %v104 = vld [vmem:[%s3 + $0xc0] sm:$0xff]
  %v105 = vld [vmem:[%s3 + $0xc8] sm:$0xff]
  %v106 = vld [vmem:[%s3 + $0xd0] sm:$0xff]
  %v107 = vld [vmem:[%s3 + $0xd8] sm:$0xff]
  %v108 = vld [vmem:[%s3 + $0xe0] sm:$0xff]
  %v109 = vld [vmem:[%s3 + $0xe8] sm:$0xff]
  %v110 = vld [vmem:[%s3 + $0xf0] sm:$0xff]
  %v111 = vld [vmem:[%s3 + $0xf8] sm:$0xff]
  %v112 = vld [vmem:[%s4] sm:$0xf]
  %v114 = vlaneseq
  %v115 = vshrl.u32 %v114, 7
  %v116 = vsub.s32 0, %v115
  %v117 = vrot.slane %v112, %v116
  %v118 = vlaneseq
  %v119 = vshrl.u32 %v118, 7
  %v120 = vsub.s32 1, %v119
  %v121 = vrot.slane %v112, %v120
  %v122 = vlaneseq
  %v123 = vshrl.u32 %v122, 7
  %v124 = vsub.s32 2, %v123
  %v125 = vrot.slane %v112, %v124
  %v126 = vlaneseq
  %v127 = vshrl.u32 %v126, 7
  %v128 = vsub.s32 3, %v127
  %v129 = vrot.slane %v112, %v128
  %v136 = vunpack.c.l.b16 %v78
  %v137 = vunpack.c.l.b16 %v79
  %v138 = vpack.c.b16 %v137, %v136
  %v172 = vunpack.c.l.b16 %v80
  %v173 = vunpack.c.h.b16 %v80
  %v174 = vunpack.c.l.b16 %v81
  %v175 = vunpack.c.h.b16 %v81
  %v176 = vunpack.c.l.b16 %v82
  %v177 = vunpack.c.h.b16 %v82
  %v178 = vunpack.c.l.b16 %v83
  %v179 = vunpack.c.h.b16 %v83
  %v180 = vunpack.c.l.b16 %v84
  %v181 = vunpack.c.h.b16 %v84
  %v182 = vunpack.c.l.b16 %v85
  %v183 = vunpack.c.h.b16 %v85
  %v184 = vunpack.c.l.b16 %v86
  %v185 = vunpack.c.h.b16 %v86
  %v186 = vunpack.c.l.b16 %v87
  %v187 = vunpack.c.h.b16 %v87
  %v188 = vunpack.c.l.b16 %v88
  %v189 = vunpack.c.h.b16 %v88
  %v190 = vunpack.c.l.b16 %v89
  %v191 = vunpack.c.h.b16 %v89
  %v192 = vunpack.c.l.b16 %v90
  %v193 = vunpack.c.h.b16 %v90
  %v194 = vunpack.c.l.b16 %v91
  %v195 = vunpack.c.h.b16 %v91
  %v196 = vunpack.c.l.b16 %v92
  %v197 = vunpack.c.h.b16 %v92
  %v198 = vunpack.c.l.b16 %v93
  %v199 = vunpack.c.h.b16 %v93
  %v200 = vunpack.c.l.b16 %v94
  %v201 = vunpack.c.h.b16 %v94
  %v202 = vunpack.c.l.b16 %v95
  %v203 = vunpack.c.h.b16 %v95
  %v204 = vunpack.c.l.b16 %v96
  %v205 = vunpack.c.h.b16 %v96
  %v206 = vunpack.c.l.b16 %v97
  %v207 = vunpack.c.h.b16 %v97
  %v208 = vunpack.c.l.b16 %v98
  %v209 = vunpack.c.h.b16 %v98
  %v210 = vunpack.c.l.b16 %v99
  %v211 = vunpack.c.h.b16 %v99
  %v212 = vunpack.c.l.b16 %v100
  %v213 = vunpack.c.h.b16 %v100
  %v214 = vunpack.c.l.b16 %v101
  %v215 = vunpack.c.h.b16 %v101
  %v216 = vunpack.c.l.b16 %v102
  %v217 = vunpack.c.h.b16 %v102
  %v218 = vunpack.c.l.b16 %v103
  %v219 = vunpack.c.h.b16 %v103
  %v220 = vunpack.c.l.b16 %v104
  %v221 = vunpack.c.h.b16 %v104
  %v222 = vunpack.c.l.b16 %v105
  %v223 = vunpack.c.h.b16 %v105
  %v224 = vunpack.c.l.b16 %v106
  %v225 = vunpack.c.h.b16 %v106
  %v226 = vunpack.c.l.b16 %v107
  %v227 = vunpack.c.h.b16 %v107
  %v228 = vunpack.c.l.b16 %v108
  %v229 = vunpack.c.h.b16 %v108
  %v230 = vunpack.c.l.b16 %v109
  %v231 = vunpack.c.h.b16 %v109
  %v232 = vunpack.c.l.b16 %v110
  %v233 = vunpack.c.h.b16 %v110
  %v234 = vunpack.c.l.b16 %v111
  %v235 = vunpack.c.h.b16 %v111
  %v236 = vpack.c.b16 %v176, %v172
  %v237 = vpack.c.b16 %v177, %v173
  %v238 = vpack.c.b16 %v178, %v174
  %v239 = vpack.c.b16 %v179, %v175
  %v240 = vpack.c.b16 %v184, %v180
  %v241 = vpack.c.b16 %v185, %v181
  %v242 = vpack.c.b16 %v186, %v182
  %v243 = vpack.c.b16 %v187, %v183
  %v244 = vpack.c.b16 %v192, %v188
  %v245 = vpack.c.b16 %v193, %v189
  %v246 = vpack.c.b16 %v194, %v190
  %v247 = vpack.c.b16 %v195, %v191
  %v248 = vpack.c.b16 %v200, %v196
  %v249 = vpack.c.b16 %v201, %v197
  %v250 = vpack.c.b16 %v202, %v198
  %v251 = vpack.c.b16 %v203, %v199
  %v252 = vpack.c.b16 %v208, %v204
  %v253 = vpack.c.b16 %v209, %v205
  %v254 = vpack.c.b16 %v210, %v206
  %v255 = vpack.c.b16 %v211, %v207
  %v256 = vpack.c.b16 %v216, %v212
  %v257 = vpack.c.b16 %v217, %v213
  %v258 = vpack.c.b16 %v218, %v214
  %v259 = vpack.c.b16 %v219, %v215
  %v260 = vpack.c.b16 %v224, %v220
  %v261 = vpack.c.b16 %v225, %v221
  %v262 = vpack.c.b16 %v226, %v222
  %v263 = vpack.c.b16 %v227, %v223
  %v264 = vpack.c.b16 %v232, %v228
  %v265 = vpack.c.b16 %v233, %v229
  %v266 = vpack.c.b16 %v234, %v230
  %v267 = vpack.c.b16 %v235, %v231
  %300 = vmatprep.subr.bf16.mxu0 %v265
  %301 = vmatpush1.bf16.msra.mxu0 %v264
  %302 = vmatprep.subr.bf16.mxu0 %v261
  %303 = vmatpush1.bf16.msra.mxu0 %v260
  %304 = vmatprep.subr.bf16.mxu0 %v257
  %305 = vmatpush1.bf16.msra.mxu0 %v256
  %306 = vmatprep.subr.bf16.mxu0 %v253
  %307 = vmatpush1.bf16.msra.mxu0 %v252
  %308 = vmatprep.subr.bf16.mxu0 %v249
  %309 = vmatpush1.bf16.msra.mxu0 %v248
  %310 = vmatprep.subr.bf16.mxu0 %v245
  %311 = vmatpush1.bf16.msra.mxu0 %v244
  %312 = vmatprep.subr.bf16.mxu0 %v241
  %313 = vmatpush1.bf16.msra.mxu0 %v240
  %314 = vmatprep.subr.bf16.mxu0 %v237
  %315 = vmatpush1.bf16.msra.mxu0 %v236
  %316 = vmatprep.subr.bf16.mxu0 0
  %317 = vmatpush2.bf16.msra.mxu0 0
  %318 = vmatprep.subr.bf16.mxu0 0
  %319 = vmatpush2.bf16.msra.mxu0 0
  %320 = vmatprep.subr.bf16.mxu0 0
  %321 = vmatpush2.bf16.msra.mxu0 0
  %322 = vmatprep.subr.bf16.mxu0 0
  %323 = vmatpush2.bf16.msra.mxu0 0
  %324 = vmatprep.subr.bf16.mxu0 0
  %325 = vmatpush2.bf16.msra.mxu0 0
  %326 = vmatprep.subr.bf16.mxu0 0
  %327 = vmatpush2.bf16.msra.mxu0 0
  %328 = vmatprep.subr.bf16.mxu0 0
  %329 = vmatpush2.bf16.msra.mxu0 0
  %330 = vmatprep.subr.bf16.mxu0 0
  %331 = vmatpush2.bf16.msra.mxu0 0
  %332 = vmatprep.mubr.bf16.mxu0 0
  %333 = vmatmul.mubr.bf16.gmra.mxu0 %v138
  %v334 = vpop.f32.mrf.mxu0
  %v335 = vadd.f32 %v117, %v334
  %v336 = vpop.f32.mrf.mxu0
  %v337 = vadd.f32 %v121, %v336
  %v338 = vpop.f32.mrf.mxu0
  %v339 = vadd.f32 %v117, %v338
  %v340 = vpop.f32.mrf.mxu0
  %v341 = vadd.f32 %v121, %v340
  %342 = vdwg.mxu0
  %343 = vmatprep.subr.bf16.mxu0 %v267
  %344 = vmatpush1.bf16.msra.mxu0 %v266
  %345 = vmatprep.subr.bf16.mxu0 %v263
  %346 = vmatpush1.bf16.msra.mxu0 %v262
  %347 = vmatprep.subr.bf16.mxu0 %v259
  %348 = vmatpush1.bf16.msra.mxu0 %v258
  %349 = vmatprep.subr.bf16.mxu0 %v255
  %350 = vmatpush1.bf16.msra.mxu0 %v254
  %351 = vmatprep.subr.bf16.mxu0 %v251
  %352 = vmatpush1.bf16.msra.mxu0 %v250
  %353 = vmatprep.subr.bf16.mxu0 %v247
  %354 = vmatpush1.bf16.msra.mxu0 %v246
  %355 = vmatprep.subr.bf16.mxu0 %v243
  %356 = vmatpush1.bf16.msra.mxu0 %v242
  %357 = vmatprep.subr.bf16.mxu0 %v239
  %358 = vmatpush1.bf16.msra.mxu0 %v238
  %359 = vmatprep.subr.bf16.mxu0 0
  %360 = vmatpush2.bf16.msra.mxu0 0
  %361 = vmatprep.subr.bf16.mxu0 0
  %362 = vmatpush2.bf16.msra.mxu0 0
  %363 = vmatprep.subr.bf16.mxu0 0
  %364 = vmatpush2.bf16.msra.mxu0 0
  %365 = vmatprep.subr.bf16.mxu0 0
  %366 = vmatpush2.bf16.msra.mxu0 0
  %367 = vmatprep.subr.bf16.mxu0 0
  %368 = vmatpush2.bf16.msra.mxu0 0
  %369 = vmatprep.subr.bf16.mxu0 0
  %370 = vmatpush2.bf16.msra.mxu0 0
  %371 = vmatprep.subr.bf16.mxu0 0
  %372 = vmatpush2.bf16.msra.mxu0 0
  %373 = vmatprep.subr.bf16.mxu0 0
  %374 = vmatpush2.bf16.msra.mxu0 0
  %375 = vmatprep.mubr.bf16.mxu0 0
  %376 = vmatmul.mubr.bf16.gmra.mxu0 %v138
  %v377 = vpop.f32.mrf.mxu0
  %v378 = vadd.f32 %v125, %v377
  %v379 = vpop.f32.mrf.mxu0
  %v380 = vadd.f32 %v129, %v379
  %v381 = vpop.f32.mrf.mxu0
  %v382 = vadd.f32 %v125, %v381
  %v383 = vpop.f32.mrf.mxu0
  %v384 = vadd.f32 %v129, %v383
  %385 = vdwg.mxu0
  %v386 = vmul.f32 %v335, 1.702
  %v387 = vmul.f32 %v337, 1.702
  %v388 = vmul.f32 %v378, 1.702
  %v389 = vmul.f32 %v380, 1.702
  %v390 = vmul.f32 %v339, 1.702
  %v391 = vmul.f32 %v341, 1.702
  %v392 = vmul.f32 %v382, 1.702
  %v393 = vmul.f32 %v384, 1.702
  %v394 = vxor.u32 %v386, 2147483648
  %v395 = vxor.u32 %v387, 2147483648
  %v396 = vxor.u32 %v388, 2147483648
  %v397 = vxor.u32 %v389, 2147483648
  %v398 = vxor.u32 %v390, 2147483648
  %v399 = vxor.u32 %v391, 2147483648
  %v400 = vxor.u32 %v392, 2147483648
  %v401 = vxor.u32 %v393, 2147483648
  %v402 = vmul.f32 %v394, 1.442695
  %v403 = vpow.pop %v402
  %v404 = vmul.f32 %v395, 1.442695
  %v405 = vpow.pop %v404
  %v406 = vmul.f32 %v396, 1.442695
  %v407 = vpow.pop %v406
  %v408 = vmul.f32 %v397, 1.442695
  %v409 = vpow.pop %v408
  %v410 = vmul.f32 %v398, 1.442695
  %v411 = vpow.pop %v410
  %v412 = vmul.f32 %v399, 1.442695
  %v413 = vpow.pop %v412
  %v414 = vmul.f32 %v400, 1.442695
  %v415 = vpow.pop %v414
  %v416 = vmul.f32 %v401, 1.442695
  %v417 = vpow.pop %v416
  %v418 = vadd.f32 %v403, 1.0
  %v419 = vadd.f32 %v405, 1.0
  %v420 = vadd.f32 %v407, 1.0
  %v421 = vadd.f32 %v409, 1.0
  %v422 = vadd.f32 %v411, 1.0
  %v423 = vadd.f32 %v413, 1.0
  %v424 = vadd.f32 %v415, 1.0
  %v425 = vadd.f32 %v417, 1.0
  %v426 = vrcp.pop %v418
  %v427 = vmul.f32 1.0, %v426
  %v428 = vrcp.pop %v419
  %v429 = vmul.f32 1.0, %v428
  %v430 = vrcp.pop %v420
  %v431 = vmul.f32 1.0, %v430
  %v432 = vrcp.pop %v421
  %v433 = vmul.f32 1.0, %v432
  %v434 = vrcp.pop %v422
  %v435 = vmul.f32 1.0, %v434
  %v436 = vrcp.pop %v423
  %v437 = vmul.f32 1.0, %v436
  %v438 = vrcp.pop %v424
  %v439 = vmul.f32 1.0, %v438
  %v440 = vrcp.pop %v425
  %v441 = vmul.f32 1.0, %v440
  %v442 = vmul.f32 %v335, %v427
  %v443 = vmul.f32 %v337, %v429
  %v444 = vmul.f32 %v378, %v431
  %v445 = vmul.f32 %v380, %v433
  %v446 = vmul.f32 %v339, %v435
  %v447 = vmul.f32 %v341, %v437
  %v448 = vmul.f32 %v382, %v439
  %v449 = vmul.f32 %v384, %v441
  %v450 = vpack.c.bf16 %v446, %v442
  %v451 = vpack.c.bf16 %v447, %v443
  %v452 = vpack.c.bf16 %v448, %v444
  %v453 = vpack.c.bf16 %v449, %v445
  %v458 = vunpack.c.l.b16 %v450
  %v459 = vunpack.c.l.b16 %v451
  %v460 = vunpack.c.l.b16 %v452
  %v461 = vunpack.c.l.b16 %v453
  %v462 = vunpack.c.h.b16 %v450
  %v463 = vunpack.c.h.b16 %v451
  %v464 = vunpack.c.h.b16 %v452
  %v465 = vunpack.c.h.b16 %v453
  %v466 = vpack.c.b16 %v459, %v458
  %v467 = vpack.c.b16 %v461, %v460
  %v468 = vpack.c.b16 %v463, %v462
  %v469 = vpack.c.b16 %v465, %v464
  %474 = vst [vmem:[%s5] sm:$0xff] %v466
  %475 = vst [vmem:[%s5 + $0x8] sm:$0xff] %v467
  %476 = vst [vmem:[%s5 + $0x10] sm:$0xff] %v468
  %477 = vst [vmem:[%s5 + $0x18] sm:$0xff] %v469
  // Predicated region
  $region26: #{clip_forward.18} parent=0 // pred_check
    _
  $region27: #{clip_forward.18} parent=0 // pred_check_branch
    %479 = sbr.rel (0) target = $region29
  $region28: #{clip_forward.18} parent=0 // pred_region
    _
  $region29: #{clip_forward.18} parent=0 // pred_fallthru
    _
  // Predicated region
  $region30: #{clip_forward.18} parent=0 // pred_check
    _
  $region31: #{clip_forward.18} parent=0 // pred_check_branch
    %481 = sbr.rel (0) target = $region33
  $region32: #{clip_forward.18} parent=0 // pred_region
    _
  $region33: #{clip_forward.18} parent=0 // pred_fallthru
    _

// kernel: clip_forward.19
$region0: #{clip_forward.19}
  #allocation0 [shape = 'u32[]', space=smem, size = 0x4, offset = 0x4, fixed_abs, tag = 'smem constant byte address 0x4 - core index']
  #allocation1 [shape = 'u32[144,128]{1,0:T(1,128)}', space=vmem, size = 0x12000, scoped, tag = 'internal scratch']
  #allocation2 [shape = 'f32[16,128]{1,0:T(8,128)}', space=vmem, size = 0x2000, scoped, tag = 'scratch operand']
  %s0 = inlined_call_operand.vmem [shape: bf16[16,512], index: 0, kind: input, shape index: {}]
  %s1 = inlined_call_operand.vmem [shape: bf16[512,128], index: 1, kind: input, shape index: {}]
  %s2 = inlined_call_operand.vmem [shape: f32[1,128], index: 2, kind: input, shape index: {}]
  %s3 = inlined_call_operand.vmem [shape: f32[16,128], index: 3, kind: input, shape index: {}, may-alias: {3,4}]
  %s4 = inlined_call_operand.vmem [shape: f32[16,128], index: 4, kind: output, shape index: {}, may-alias: {3,4}]
  %s5 = sld [smem:[#allocation0]]
  $region34: #{clip_forward.19} parent=0
    _
  %s7 = ssub.s32 1, %s5
  %s8 = scalar_select 0, %s7, %s5
  // Predicated region
  $region2: #{clip_forward.19} parent=0 // pred_check
    _
  $region3: #{clip_forward.19} parent=0 // pred_check_branch
    %10 = sbr.rel (0) target = $region5
  $region4: #{clip_forward.19} parent=0 // pred_region
    _
  $region5: #{clip_forward.19} parent=0 // pred_fallthru
    _
  // Predicated region
  $region6: #{clip_forward.19} parent=0 // pred_check
    _
  $region7: #{clip_forward.19} parent=0 // pred_check_branch
    %12 = sbr.rel (0) target = $region9
  $region8: #{clip_forward.19} parent=0 // pred_region
    _
  $region9: #{clip_forward.19} parent=0 // pred_fallthru
    _
  // Predicated region
  $region10: #{clip_forward.19} parent=0 // pred_check
    _
  $region11: #{clip_forward.19} parent=0 // pred_check_branch
    %14 = sbr.rel (0) target = $region13
  $region12: #{clip_forward.19} parent=0 // pred_region
    _
  $region13: #{clip_forward.19} parent=0 // pred_fallthru
    _
  // Predicated region
  $region14: #{clip_forward.19} parent=0 // pred_check
    _
  $region15: #{clip_forward.19} parent=0 // pred_check_branch
    %16 = sbr.rel (0) target = $region17
  $region16: #{clip_forward.19} parent=0 // pred_region
    _
  $region17: #{clip_forward.19} parent=0 // pred_fallthru
    _
  %p18 = scmp.eq.s32.totalorder 0, 0
  // Predicated region
  $region18: #{clip_forward.19} parent=0 // pred_check
    %p19 = pneg %p18
  $region19: #{clip_forward.19} parent=0 // pred_check_branch
    %21 = sbr.rel (%p19) target = $region21
  $region20: #{clip_forward.19} parent=0 // pred_region
    %v22 = vld [vmem:[%s3] sm:$0xff]
    %v23 = vld [vmem:[%s3 + $0x8] sm:$0xff]
    %24 = vst [vmem:[#allocation2] sm:$0xff] %v22
    %25 = vst [vmem:[#allocation2 + $0x8] sm:$0xff] %v23
  $region21: #{clip_forward.19} parent=0 // pred_fallthru
    _
  %v26 = vld [vmem:[#allocation2] sm:$0xff]
  %v27 = vld [vmem:[#allocation2 + $0x8] sm:$0xff]
  %v28 = vld [vmem:[%s0] sm:$0xff]
  %v29 = vld [vmem:[%s0 + $0x8] sm:$0xff]
  %v30 = vld [vmem:[%s0 + $0x10] sm:$0xff]
  %v31 = vld [vmem:[%s0 + $0x18] sm:$0xff]
  %v32 = vld [vmem:[%s1] sm:$0xf]
  %v33 = vld [vmem:[%s1 + $0x4] sm:$0xf]
  %v34 = vld [vmem:[%s1 + $0x8] sm:$0xf]
  %v35 = vld [vmem:[%s1 + $0xc] sm:$0xf]
  %v36 = vld [vmem:[%s1 + $0x10] sm:$0xf]
  %v37 = vld [vmem:[%s1 + $0x14] sm:$0xf]
  %v38 = vld [vmem:[%s1 + $0x18] sm:$0xf]
  %v39 = vld [vmem:[%s1 + $0x1c] sm:$0xf]
  %v40 = vld [vmem:[%s1 + $0x20] sm:$0xf]
  %v41 = vld [vmem:[%s1 + $0x24] sm:$0xf]
  %v42 = vld [vmem:[%s1 + $0x28] sm:$0xf]
  %v43 = vld [vmem:[%s1 + $0x2c] sm:$0xf]
  %v44 = vld [vmem:[%s1 + $0x30] sm:$0xf]
  %v45 = vld [vmem:[%s1 + $0x34] sm:$0xf]
  %v46 = vld [vmem:[%s1 + $0x38] sm:$0xf]
  %v47 = vld [vmem:[%s1 + $0x3c] sm:$0xf]
  %v48 = vld [vmem:[%s1 + $0x40] sm:$0xf]
  %v49 = vld [vmem:[%s1 + $0x44] sm:$0xf]
  %v50 = vld [vmem:[%s1 + $0x48] sm:$0xf]
  %v51 = vld [vmem:[%s1 + $0x4c] sm:$0xf]
  %v52 = vld [vmem:[%s1 + $0x50] sm:$0xf]
  %v53 = vld [vmem:[%s1 + $0x54] sm:$0xf]
  %v54 = vld [vmem:[%s1 + $0x58] sm:$0xf]
  %v55 = vld [vmem:[%s1 + $0x5c] sm:$0xf]
  %v56 = vld [vmem:[%s1 + $0x60] sm:$0xf]
  %v57 = vld [vmem:[%s1 + $0x64] sm:$0xf]
  %v58 = vld [vmem:[%s1 + $0x68] sm:$0xf]
  %v59 = vld [vmem:[%s1 + $0x6c] sm:$0xf]
  %v60 = vld [vmem:[%s1 + $0x70] sm:$0xf]
  %v61 = vld [vmem:[%s1 + $0x74] sm:$0xf]
  %v62 = vld [vmem:[%s1 + $0x78] sm:$0xf]
  %v63 = vld [vmem:[%s1 + $0x7c] sm:$0xf]
  %v64 = vld [vmem:[%s1 + $0x80] sm:$0xf]
  %v65 = vld [vmem:[%s1 + $0x84] sm:$0xf]
  %v66 = vld [vmem:[%s1 + $0x88] sm:$0xf]
  %v67 = vld [vmem:[%s1 + $0x8c] sm:$0xf]
  %v68 = vld [vmem:[%s1 + $0x90] sm:$0xf]
  %v69 = vld [vmem:[%s1 + $0x94] sm:$0xf]
  %v70 = vld [vmem:[%s1 + $0x98] sm:$0xf]
  %v71 = vld [vmem:[%s1 + $0x9c] sm:$0xf]
  %v72 = vld [vmem:[%s1 + $0xa0] sm:$0xf]
  %v73 = vld [vmem:[%s1 + $0xa4] sm:$0xf]
  %v74 = vld [vmem:[%s1 + $0xa8] sm:$0xf]
  %v75 = vld [vmem:[%s1 + $0xac] sm:$0xf]
  %v76 = vld [vmem:[%s1 + $0xb0] sm:$0xf]
  %v77 = vld [vmem:[%s1 + $0xb4] sm:$0xf]
  %v78 = vld [vmem:[%s1 + $0xb8] sm:$0xf]
  %v79 = vld [vmem:[%s1 + $0xbc] sm:$0xf]
  %v80 = vld [vmem:[%s1 + $0xc0] sm:$0xf]
  %v81 = vld [vmem:[%s1 + $0xc4] sm:$0xf]
  %v82 = vld [vmem:[%s1 + $0xc8] sm:$0xf]
  %v83 = vld [vmem:[%s1 + $0xcc] sm:$0xf]
  %v84 = vld [vmem:[%s1 + $0xd0] sm:$0xf]
  %v85 = vld [vmem:[%s1 + $0xd4] sm:$0xf]
  %v86 = vld [vmem:[%s1 + $0xd8] sm:$0xf]
  %v87 = vld [vmem:[%s1 + $0xdc] sm:$0xf]
  %v88 = vld [vmem:[%s1 + $0xe0] sm:$0xf]
  %v89 = vld [vmem:[%s1 + $0xe4] sm:$0xf]
  %v90 = vld [vmem:[%s1 + $0xe8] sm:$0xf]
  %v91 = vld [vmem:[%s1 + $0xec] sm:$0xf]
  %v92 = vld [vmem:[%s1 + $0xf0] sm:$0xf]
  %v93 = vld [vmem:[%s1 + $0xf4] sm:$0xf]
  %v94 = vld [vmem:[%s1 + $0xf8] sm:$0xf]
  %v95 = vld [vmem:[%s1 + $0xfc] sm:$0xf]
  %v100 = vunpack.c.l.b16 %v28
  %v101 = vunpack.c.h.b16 %v28
  %v102 = vunpack.c.l.b16 %v29
  %v103 = vunpack.c.h.b16 %v29
  %v104 = vunpack.c.l.b16 %v30
  %v105 = vunpack.c.h.b16 %v30
  %v106 = vunpack.c.l.b16 %v31
  %v107 = vunpack.c.h.b16 %v31
  %v108 = vpack.c.b16 %v104, %v100
  %v109 = vpack.c.b16 %v105, %v101
  %v110 = vpack.c.b16 %v106, %v102
  %v111 = vpack.c.b16 %v107, %v103
  %v180 = vunpack.c.l.b16 %v32
  %v181 = vunpack.c.l.b16 %v33
  %v182 = vunpack.c.l.b16 %v34
  %v183 = vunpack.c.l.b16 %v35
  %v184 = vunpack.c.l.b16 %v36
  %v185 = vunpack.c.l.b16 %v37
  %v186 = vunpack.c.l.b16 %v38
  %v187 = vunpack.c.l.b16 %v39
  %v188 = vunpack.c.l.b16 %v40
  %v189 = vunpack.c.l.b16 %v41
  %v190 = vunpack.c.l.b16 %v42
  %v191 = vunpack.c.l.b16 %v43
  %v192 = vunpack.c.l.b16 %v44
  %v193 = vunpack.c.l.b16 %v45
  %v194 = vunpack.c.l.b16 %v46
  %v195 = vunpack.c.l.b16 %v47
  %v196 = vunpack.c.l.b16 %v48
  %v197 = vunpack.c.l.b16 %v49
  %v198 = vunpack.c.l.b16 %v50
  %v199 = vunpack.c.l.b16 %v51
  %v200 = vunpack.c.l.b16 %v52
  %v201 = vunpack.c.l.b16 %v53
  %v202 = vunpack.c.l.b16 %v54
  %v203 = vunpack.c.l.b16 %v55
  %v204 = vunpack.c.l.b16 %v56
  %v205 = vunpack.c.l.b16 %v57
  %v206 = vunpack.c.l.b16 %v58
  %v207 = vunpack.c.l.b16 %v59
  %v208 = vunpack.c.l.b16 %v60
  %v209 = vunpack.c.l.b16 %v61
  %v210 = vunpack.c.l.b16 %v62
  %v211 = vunpack.c.l.b16 %v63
  %v212 = vunpack.c.l.b16 %v64
  %v213 = vunpack.c.l.b16 %v65
  %v214 = vunpack.c.l.b16 %v66
  %v215 = vunpack.c.l.b16 %v67
  %v216 = vunpack.c.l.b16 %v68
  %v217 = vunpack.c.l.b16 %v69
  %v218 = vunpack.c.l.b16 %v70
  %v219 = vunpack.c.l.b16 %v71
  %v220 = vunpack.c.l.b16 %v72
  %v221 = vunpack.c.l.b16 %v73
  %v222 = vunpack.c.l.b16 %v74
  %v223 = vunpack.c.l.b16 %v75
  %v224 = vunpack.c.l.b16 %v76
  %v225 = vunpack.c.l.b16 %v77
  %v226 = vunpack.c.l.b16 %v78
  %v227 = vunpack.c.l.b16 %v79
  %v228 = vunpack.c.l.b16 %v80
  %v229 = vunpack.c.l.b16 %v81
  %v230 = vunpack.c.l.b16 %v82
  %v231 = vunpack.c.l.b16 %v83
  %v232 = vunpack.c.l.b16 %v84
  %v233 = vunpack.c.l.b16 %v85
  %v234 = vunpack.c.l.b16 %v86
  %v235 = vunpack.c.l.b16 %v87
  %v236 = vunpack.c.l.b16 %v88
  %v237 = vunpack.c.l.b16 %v89
  %v238 = vunpack.c.l.b16 %v90
  %v239 = vunpack.c.l.b16 %v91
  %v240 = vunpack.c.l.b16 %v92
  %v241 = vunpack.c.l.b16 %v93
  %v242 = vunpack.c.l.b16 %v94
  %v243 = vunpack.c.l.b16 %v95
  %v244 = vpack.c.b16 %v181, %v180
  %v245 = vpack.c.b16 %v183, %v182
  %v246 = vpack.c.b16 %v185, %v184
  %v247 = vpack.c.b16 %v187, %v186
  %v248 = vpack.c.b16 %v189, %v188
  %v249 = vpack.c.b16 %v191, %v190
  %v250 = vpack.c.b16 %v193, %v192
  %v251 = vpack.c.b16 %v195, %v194
  %v252 = vpack.c.b16 %v197, %v196
  %v253 = vpack.c.b16 %v199, %v198
  %v254 = vpack.c.b16 %v201, %v200
  %v255 = vpack.c.b16 %v203, %v202
  %v256 = vpack.c.b16 %v205, %v204
  %v257 = vpack.c.b16 %v207, %v206
  %v258 = vpack.c.b16 %v209, %v208
  %v259 = vpack.c.b16 %v211, %v210
  %v260 = vpack.c.b16 %v213, %v212
  %v261 = vpack.c.b16 %v215, %v214
  %v262 = vpack.c.b16 %v217, %v216
  %v263 = vpack.c.b16 %v219, %v218
  %v264 = vpack.c.b16 %v221, %v220
  %v265 = vpack.c.b16 %v223, %v222
  %v266 = vpack.c.b16 %v225, %v224
  %v267 = vpack.c.b16 %v227, %v226
  %v268 = vpack.c.b16 %v229, %v228
  %v269 = vpack.c.b16 %v231, %v230
  %v270 = vpack.c.b16 %v233, %v232
  %v271 = vpack.c.b16 %v235, %v234
  %v272 = vpack.c.b16 %v237, %v236
  %v273 = vpack.c.b16 %v239, %v238
  %v274 = vpack.c.b16 %v241, %v240
  %v275 = vpack.c.b16 %v243, %v242
  %308 = vmatprep.subr.bf16.mxu0 0
  %309 = vmatpush1.bf16.msra.mxu0 %v251
  %310 = vmatprep.subr.bf16.mxu0 0
  %311 = vmatpush1.bf16.msra.mxu0 %v250
  %312 = vmatprep.subr.bf16.mxu0 0
  %313 = vmatpush1.bf16.msra.mxu0 %v249
  %314 = vmatprep.subr.bf16.mxu0 0
  %315 = vmatpush1.bf16.msra.mxu0 %v248
  %316 = vmatprep.subr.bf16.mxu0 0
  %317 = vmatpush1.bf16.msra.mxu0 %v247
  %318 = vmatprep.subr.bf16.mxu0 0
  %319 = vmatpush1.bf16.msra.mxu0 %v246
  %320 = vmatprep.subr.bf16.mxu0 0
  %321 = vmatpush1.bf16.msra.mxu0 %v245
  %322 = vmatprep.subr.bf16.mxu0 0
  %323 = vmatpush1.bf16.msra.mxu0 %v244
  %324 = vmatprep.subr.bf16.mxu0 0
  %325 = vmatpush2.bf16.msra.mxu0 %v259
  %326 = vmatprep.subr.bf16.mxu0 0
  %327 = vmatpush2.bf16.msra.mxu0 %v258
  %328 = vmatprep.subr.bf16.mxu0 0
  %329 = vmatpush2.bf16.msra.mxu0 %v257
  %330 = vmatprep.subr.bf16.mxu0 0
  %331 = vmatpush2.bf16.msra.mxu0 %v256
  %332 = vmatprep.subr.bf16.mxu0 0
  %333 = vmatpush2.bf16.msra.mxu0 %v255
  %334 = vmatprep.subr.bf16.mxu0 0
  %335 = vmatpush2.bf16.msra.mxu0 %v254
  %336 = vmatprep.subr.bf16.mxu0 0
  %337 = vmatpush2.bf16.msra.mxu0 %v253
  %338 = vmatprep.subr.bf16.mxu0 0
  %339 = vmatpush2.bf16.msra.mxu0 %v252
  %340 = vmatprep.mubr.bf16.mxu0 %v109
  %341 = vmatmul.mubr.bf16.gmra.mxu0 %v108
  %v342 = vpop.f32.mrf.mxu0
  %v343 = vadd.f32 0.0, %v342
  %v344 = vpop.f32.mrf.mxu0
  %v345 = vpop.f32.mrf.mxu0
  %v346 = vadd.f32 0.0, %v345
  %v347 = vpop.f32.mrf.mxu0
  %348 = vdwg.mxu0
  %349 = vmatprep.subr.bf16.mxu0 0
  %350 = vmatpush1.bf16.msra.mxu0 %v267
  %351 = vmatprep.subr.bf16.mxu0 0
  %352 = vmatpush1.bf16.msra.mxu0 %v266
  %353 = vmatprep.subr.bf16.mxu0 0
  %354 = vmatpush1.bf16.msra.mxu0 %v265
  %355 = vmatprep.subr.bf16.mxu0 0
  %356 = vmatpush1.bf16.msra.mxu0 %v264
  %357 = vmatprep.subr.bf16.mxu0 0
  %358 = vmatpush1.bf16.msra.mxu0 %v263
  %359 = vmatprep.subr.bf16.mxu0 0
  %360 = vmatpush1.bf16.msra.mxu0 %v262
  %361 = vmatprep.subr.bf16.mxu0 0
  %362 = vmatpush1.bf16.msra.mxu0 %v261
  %363 = vmatprep.subr.bf16.mxu0 0
  %364 = vmatpush1.bf16.msra.mxu0 %v260
  %365 = vmatprep.subr.bf16.mxu0 0
  %366 = vmatpush2.bf16.msra.mxu0 %v275
  %367 = vmatprep.subr.bf16.mxu0 0
  %368 = vmatpush2.bf16.msra.mxu0 %v274
  %369 = vmatprep.subr.bf16.mxu0 0
  %370 = vmatpush2.bf16.msra.mxu0 %v273
  %371 = vmatprep.subr.bf16.mxu0 0
  %372 = vmatpush2.bf16.msra.mxu0 %v272
  %373 = vmatprep.subr.bf16.mxu0 0
  %374 = vmatpush2.bf16.msra.mxu0 %v271
  %375 = vmatprep.subr.bf16.mxu0 0
  %376 = vmatpush2.bf16.msra.mxu0 %v270
  %377 = vmatprep.subr.bf16.mxu0 0
  %378 = vmatpush2.bf16.msra.mxu0 %v269
  %379 = vmatprep.subr.bf16.mxu0 0
  %380 = vmatpush2.bf16.msra.mxu0 %v268
  %381 = vmatprep.mubr.bf16.mxu0 %v111
  %382 = vmatmul.mubr.bf16.gmra.mxu0 %v110
  %v383 = vpop.f32.mrf.mxu0
  %v384 = vadd.f32 %v343, %v383
  %v385 = vpop.f32.mrf.mxu0
  %v386 = vpop.f32.mrf.mxu0
  %v387 = vadd.f32 %v346, %v386
  %v388 = vpop.f32.mrf.mxu0
  %389 = vdwg.mxu0
  %v390 = vadd.f32 %v26, %v384
  %v391 = vadd.f32 %v27, %v387
  %392 = vst [vmem:[#allocation2] sm:$0xff] %v390
  %393 = vst [vmem:[#allocation2 + $0x8] sm:$0xff] %v391
  // Predicated region
  $region22: #{clip_forward.19} parent=0 // pred_check
    %p394 = pneg %p18
  $region23: #{clip_forward.19} parent=0 // pred_check_branch
    %396 = sbr.rel (%p394) target = $region25
  $region24: #{clip_forward.19} parent=0 // pred_region
    %v397 = vld [vmem:[#allocation2] sm:$0xff]
    %v398 = vld [vmem:[#allocation2 + $0x8] sm:$0xff]
    %v399 = vld [vmem:[%s2] sm:$0x1]
    %v401 = vlaneseq
    %v402 = vshrl.u32 %v401, 7
    %v403 = vsub.s32 0, %v402
    %v404 = vrot.slane %v399, %v403
    %v406 = vadd.f32 %v397, %v404
    %v407 = vadd.f32 %v398, %v404
    %408 = vst [vmem:[%s4] sm:$0xff] %v406
    %409 = vst [vmem:[%s4 + $0x8] sm:$0xff] %v407
  $region25: #{clip_forward.19} parent=0 // pred_fallthru
    _
  // Predicated region
  $region26: #{clip_forward.19} parent=0 // pred_check
    _
  $region27: #{clip_forward.19} parent=0 // pred_check_branch
    %411 = sbr.rel (0) target = $region29
  $region28: #{clip_forward.19} parent=0 // pred_region
    _
  $region29: #{clip_forward.19} parent=0 // pred_fallthru
    _
  // Predicated region
  $region30: #{clip_forward.19} parent=0 // pred_check
    _
  $region31: #{clip_forward.19} parent=0 // pred_check_branch
    %413 = sbr.rel (0) target = $region33
  $region32: #{clip_forward.19} parent=0 // pred_region
    _
  $region33: #{clip_forward.19} parent=0 // pred_fallthru
    _

</llo_original>
